<compile_context>
chip_gen: v5e
topology: v5e:2x2
jax: 0.10.0
libtpu: 0.0.40
codegen_flags: <defaults>
</compile_context>

<pallas_src>
import jax
import jax.numpy as jnp
from jax.experimental import pallas as pl
from jax.experimental.pallas import tpu as pltpu

IN_SIZE = 384                  # stand-in for 6890 * 3 = 20670
HIDDEN = 256                   # stand-in for 1024
OUT_SIZE = 24 * 3 * 3 + 10     # 226 (kept exact)
OUT_PAD = 256                  # lane-dense output width (sliced to 226 outside)
K_TILE = 128                   # w1 K-streaming slab (IN_SIZE % K_TILE == 0)
MAX_BATCH_TILE = 256           # rows per grid step (fills v6e/v7x MXU)
WDTYPE = jnp.bfloat16          # MXU operand dtype; accumulation stays f32


def _mlp_kernel(x_ref,
                w1, b1,
                wa1, ba1, wb1, bb1,
                wa2, ba2, wb2, bb2,
                wo, bo,
                out_ref, acc_ref):
    """FCBlock -> FCResBlock -> FCResBlock -> Linear.

    Grid = (batch_tiles, k_tiles).  The first layer accumulates x @ w1 over
    K slabs into `acc_ref`; the rest of the network runs on the last K step.
    All BatchNorms are pre-folded into the weights/biases (eval mode).
    """
    f32 = jnp.float32
    k = pl.program_id(1)

    @pl.when(k == 0)
    def _():
        acc_ref[...] = jnp.zeros_like(acc_ref)

    # K-tiled first Linear: bf16 x bf16 -> f32 accumulate.
    acc_ref[...] += jnp.dot(x_ref[...], w1[...], preferred_element_type=f32)

    @pl.when(k == pl.num_programs(1) - 1)
    def _():
        # FCBlock tail: (folded BN) bias + ReLU.
        h = jnp.maximum(acc_ref[...] + b1[...], 0.0)

        def res_block(h, wa, ba, wb, bb):
            # fc_block = Linear+BN -> ReLU -> Linear+BN ; out = relu(h + fc_block(h))
            r = jnp.dot(h.astype(WDTYPE), wa[...], preferred_element_type=f32) + ba[...]
            r = jnp.maximum(r, 0.0)
            r = jnp.dot(r.astype(WDTYPE), wb[...], preferred_element_type=f32) + bb[...]
            return jnp.maximum(h + r, 0.0)

        h = res_block(h, wa1, ba1, wb1, bb1)
        h = res_block(h, wa2, ba2, wb2, bb2)

        out_ref[...] = (jnp.dot(h.astype(WDTYPE), wo[...],
                                preferred_element_type=f32)
                        + bo[...]).astype(out_ref.dtype)


def smpl_param_regressor_mlp(x, params):
    """Runs the 6-Linear-layer MLP in one Pallas kernel, tiled over (batch, K)."""
    B, D = x.shape
    assert D == IN_SIZE and IN_SIZE % K_TILE == 0
    x = x.astype(WDTYPE)

    # Batch tile: as large as possible (<=256) to fill the MXU; pad B to fit.
    bt = MAX_BATCH_TILE if B >= MAX_BATCH_TILE else (-(-B // 8) * 8)
    Bp = -(-B // bt) * bt
    if Bp != B:
        x = jnp.pad(x, ((0, Bp - B), (0, 0)))
    n_b = Bp // bt
    n_k = IN_SIZE // K_TILE

    (w1, b1, wa1, ba1, wb1, bb1, wa2, ba2, wb2, bb2, wo, bo) = params

    def resident(shape):
        # Constant block index -> DMA'd once, stays VMEM-resident across grid.
        return pl.BlockSpec(shape, lambda i, k: (0, 0))

    in_specs = [
        pl.BlockSpec((bt, K_TILE), lambda i, k: (i, k)),      # x   (batch, K slab)
        pl.BlockSpec((K_TILE, HIDDEN), lambda i, k: (k, 0)),  # w1  (K-streamed)
        resident(b1.shape),
        resident(wa1.shape), resident(ba1.shape),
        resident(wb1.shape), resident(bb1.shape),
        resident(wa2.shape), resident(ba2.shape),
        resident(wb2.shape), resident(bb2.shape),
        resident(wo.shape), resident(bo.shape),
    ]
    out_specs = pl.BlockSpec((bt, OUT_PAD), lambda i, k: (i, 0))

    feats = pl.pallas_call(
        _mlp_kernel,
        out_shape=jax.ShapeDtypeStruct((Bp, OUT_PAD), jnp.float32),
        grid_spec=pltpu.PrefetchScalarGridSpec(
            num_scalar_prefetch=0,
            grid=(n_b, n_k),                      # K (reduction) axis last
            in_specs=in_specs,
            out_specs=out_specs,
            scratch_shapes=[pltpu.VMEM((bt, HIDDEN), jnp.float32)],
        ),
        compiler_params=pltpu.CompilerParams(
            dimension_semantics=("parallel", "arbitrary"),
            # Plenty for stand-in sizes; raise toward physical VMEM when using
            # the real 20670x1024 / 1024x1024 weights.
            vmem_limit_bytes=32 * 1024 * 1024,
        ),
    )(x, *params)

    return feats[:B, :OUT_SIZE]


def _polar_orthogonalize(m, iters=20):
    """Newton-Schulz polar factor U @ V^T of each 3x3 matrix.

    Numerically equivalent to the reference's torch.linalg.svd-based
    orthogonalization (including det=-1 reflections); pure matmul/elementwise
    work instead of an iterative batched tiny-matrix SVD.
    """
    f32 = jnp.float32
    m = m.astype(f32)
    norm = jnp.sqrt(jnp.sum(m * m, axis=(-2, -1), keepdims=True)) + 1e-12
    x = m / norm                                  # singular values now <= 1
    eye = jnp.eye(3, dtype=f32)

    def body(_, x):
        xtx = jnp.einsum("nji,njk->nik", x, x)    # x^T x
        return 0.5 * jnp.einsum("nij,njk->nik", x, 3.0 * eye - xtx)

    return jax.lax.fori_loop(0, iters, body, x)


def smpl_param_regressor_forward(x, params):
    """Full forward: Pallas MLP + rotmat/betas split + polar orthogonalization."""
    B = x.shape[0]
    x = x.reshape(B, -1)
    feats = smpl_param_regressor_mlp(x, params)           # (B, 226) f32

    rot_flat = feats[:, :24 * 3 * 3].reshape(-1, 3, 3)
    betas = feats[:, 24 * 3 * 3:]

    # TODO(synk): torch.linalg.svd has no Pallas/TPU primitive; the equivalent
    # U @ V^T is computed via Newton-Schulz polar decomposition in plain JAX.
    rotmat = _polar_orthogonalize(rot_flat).reshape(B, 24, 3, 3)
    return rotmat, betas


def init_params(key):
    """PyTorch-default Linear init with eval-mode BatchNorm folded in."""
    def linear_init(k, fan_in, fan_out):
        k1, k2 = jax.random.split(k)
        bound = 1.0 / jnp.sqrt(jnp.float32(fan_in))
        w = jax.random.uniform(k1, (fan_in, fan_out), jnp.float32, -bound, bound)
        b = jax.random.uniform(k2, (1, fan_out), jnp.float32, -bound, bound)
        return w, b

    def fold_bn(w, b, eps=1e-5):
        # BatchNorm1d eval defaults: gamma=1, beta=0, running_mean=0, running_var=1.
        n = w.shape[1]
        gamma = jnp.ones((1, n), jnp.float32)
        beta = jnp.zeros((1, n), jnp.float32)
        mean = jnp.zeros((1, n), jnp.float32)
        var = jnp.ones((1, n), jnp.float32)
        scale = gamma / jnp.sqrt(var + eps)
        shift = beta - mean * scale
        return (w * scale).astype(WDTYPE), (b * scale + shift)

    keys = jax.random.split(key, 6)
    params = []
    # FCBlock(IN_SIZE, HIDDEN): Linear + BN (folded)
    w, b = fold_bn(*linear_init(keys[0], IN_SIZE, HIDDEN))
    params += [w, b]
    # Two FCResBlocks: (Linear+BN, Linear+BN) each, folded
    for k in keys[1:5]:
        w, b = fold_bn(*linear_init(k, HIDDEN, HIDDEN))
        params += [w, b]
    # Final Linear(HIDDEN, 226) padded to 256 lanes with zeros.
    wo, bo = linear_init(keys[5], HIDDEN, OUT_SIZE)
    wo = jnp.pad(wo, ((0, 0), (0, OUT_PAD - OUT_SIZE))).astype(WDTYPE)
    bo = jnp.pad(bo, ((0, 0), (0, OUT_PAD - OUT_SIZE)))
    params += [wo, bo]
    return tuple(params)


if __name__ == "__main__":
    key = jax.random.PRNGKey(0)
    kx, kp = jax.random.split(key)

    B = 16
    x = jax.random.normal(kx, (B, IN_SIZE), dtype=jnp.float32)
    params = init_params(kp)

    rotmat, betas = smpl_param_regressor_forward(x, params)
    jax.block_until_ready((rotmat, betas))

    assert rotmat.shape == (B, 24, 3, 3), rotmat.shape
    assert betas.shape == (B, 10), betas.shape
    assert rotmat.dtype == jnp.float32 and betas.dtype == jnp.float32
    assert bool(jnp.all(jnp.isfinite(rotmat))) and bool(jnp.all(jnp.isfinite(betas)))
    print("KERNEL_OK")
</pallas_src>

<mosaic_0001>
module attributes {stable_mosaic.version = 11 : i64} {
  func.func @_mlp_kernel(%arg0: i32, %arg1: i32, %arg2: memref<16x128xbf16, #tpu.memory_space<vmem>>, %arg3: memref<128x256xbf16, #tpu.memory_space<vmem>>, %arg4: memref<1x256xf32, #tpu.memory_space<vmem>>, %arg5: memref<256x256xbf16, #tpu.memory_space<vmem>>, %arg6: memref<1x256xf32, #tpu.memory_space<vmem>>, %arg7: memref<256x256xbf16, #tpu.memory_space<vmem>>, %arg8: memref<1x256xf32, #tpu.memory_space<vmem>>, %arg9: memref<256x256xbf16, #tpu.memory_space<vmem>>, %arg10: memref<1x256xf32, #tpu.memory_space<vmem>>, %arg11: memref<256x256xbf16, #tpu.memory_space<vmem>>, %arg12: memref<1x256xf32, #tpu.memory_space<vmem>>, %arg13: memref<256x256xbf16, #tpu.memory_space<vmem>>, %arg14: memref<1x256xf32, #tpu.memory_space<vmem>>, %arg15: memref<16x256xf32, #tpu.memory_space<vmem>>, %arg16: memref<16x256xf32, #tpu.memory_space<vmem>>) attributes {dimension_semantics = [#tpu.dimension_semantics<parallel>, #tpu.dimension_semantics<arbitrary>], iteration_bounds = array<i64: 1, 3>, scalar_prefetch = 0 : i64, scratch_operands = 1 : i64, tpu.core_type = #tpu.core_type<tc>, window_params = [{transform_indices = @transform_0, window_bounds = array<i64: 16, 128>}, {transform_indices = @transform_1, window_bounds = array<i64: 128, 256>}, {pipeline_mode = #tpu.pipeline_mode<synchronous>, transform_indices = @transform_2, window_bounds = array<i64: 1, 256>}, {pipeline_mode = #tpu.pipeline_mode<synchronous>, transform_indices = @transform_3, window_bounds = array<i64: 256, 256>}, {pipeline_mode = #tpu.pipeline_mode<synchronous>, transform_indices = @transform_4, window_bounds = array<i64: 1, 256>}, {pipeline_mode = #tpu.pipeline_mode<synchronous>, transform_indices = @transform_5, window_bounds = array<i64: 256, 256>}, {pipeline_mode = #tpu.pipeline_mode<synchronous>, transform_indices = @transform_6, window_bounds = array<i64: 1, 256>}, {pipeline_mode = #tpu.pipeline_mode<synchronous>, transform_indices = @transform_7, window_bounds = array<i64: 256, 256>}, {pipeline_mode = #tpu.pipeline_mode<synchronous>, transform_indices = @transform_8, window_bounds = array<i64: 1, 256>}, {pipeline_mode = #tpu.pipeline_mode<synchronous>, transform_indices = @transform_9, window_bounds = array<i64: 256, 256>}, {pipeline_mode = #tpu.pipeline_mode<synchronous>, transform_indices = @transform_10, window_bounds = array<i64: 1, 256>}, {pipeline_mode = #tpu.pipeline_mode<synchronous>, transform_indices = @transform_11, window_bounds = array<i64: 256, 256>}, {pipeline_mode = #tpu.pipeline_mode<synchronous>, transform_indices = @transform_12, window_bounds = array<i64: 1, 256>}, {transform_indices = @transform_13, window_bounds = array<i64: 16, 256>}]} {
    %c0_i32 = arith.constant 0 : i32
    %0 = arith.cmpi eq, %arg1, %c0_i32 : i32
    %1 = arith.extui %0 : i1 to i32
    %c0_i32_0 = arith.constant 0 : i32
    %2 = arith.cmpi ne, %1, %c0_i32_0 : i32
    scf.if %2 {
      %cst_9 = arith.constant 0.000000e+00 : f32
      %12 = vector.broadcast %cst_9 : f32 to vector<16x256xf32>
      %c0_10 = arith.constant 0 : index
      %c0_11 = arith.constant 0 : index
      %13 = vector.load %arg16[%c0_10, %c0_11] : memref<16x256xf32, #tpu.memory_space<vmem>>, vector<16x256xf32>
      tpu.vector_store %arg16[%c0_10, %c0_11], %12 {strides = array<i32>} : memref<16x256xf32, #tpu.memory_space<vmem>>, vector<16x256xf32>,
    } else {
    }
    %c0 = arith.constant 0 : index
    %c0_1 = arith.constant 0 : index
    %3 = vector.load %arg16[%c0, %c0_1] : memref<16x256xf32, #tpu.memory_space<vmem>>, vector<16x256xf32>
    %c0_2 = arith.constant 0 : index
    %c0_3 = arith.constant 0 : index
    %4 = vector.load %arg2[%c0_2, %c0_3] : memref<16x128xbf16, #tpu.memory_space<vmem>>, vector<16x128xbf16>
    %c0_4 = arith.constant 0 : index
    %c0_5 = arith.constant 0 : index
    %5 = vector.load %arg3[%c0_4, %c0_5] : memref<128x256xbf16, #tpu.memory_space<vmem>>, vector<128x256xbf16>
    %cst = arith.constant dense<0.000000e+00> : vector<16x256xf32>
    %6 = tpu.matmul %4, %5, %cst {dimension_numbers = #tpu.dot_dimension_numbers<[1], [0], [0], [1], [0, 0, 1, 1], [], []>} : vector<16x128xbf16>, vector<128x256xbf16>, vector<16x256xf32> -> vector<16x256xf32>
    %7 = arith.addf %3, %6 : vector<16x256xf32>
    %c0_6 = arith.constant 0 : index
    %c0_7 = arith.constant 0 : index
    %8 = vector.load %arg16[%c0_6, %c0_7] : memref<16x256xf32, #tpu.memory_space<vmem>>, vector<16x256xf32>
    tpu.vector_store %arg16[%c0_6, %c0_7], %7 {strides = array<i32>} : memref<16x256xf32, #tpu.memory_space<vmem>>, vector<16x256xf32>,
    %c2_i32 = arith.constant 2 : i32
    %9 = arith.cmpi eq, %arg1, %c2_i32 : i32
    %10 = arith.extui %9 : i1 to i32
    %c0_i32_8 = arith.constant 0 : i32
    %11 = arith.cmpi ne, %10, %c0_i32_8 : i32
    scf.if %11 {
      %c0_9 = arith.constant 0 : index
      %c0_10 = arith.constant 0 : index
      %12 = vector.load %arg16[%c0_9, %c0_10] : memref<16x256xf32, #tpu.memory_space<vmem>>, vector<16x256xf32>
      %c0_11 = arith.constant 0 : index
      %c0_12 = arith.constant 0 : index
      %13 = vector.load %arg4[%c0_11, %c0_12] : memref<1x256xf32, #tpu.memory_space<vmem>>, vector<1x256xf32>
      %14 = vector.broadcast %13 : vector<1x256xf32> to vector<16x256xf32>
      %15 = arith.addf %12, %14 : vector<16x256xf32>
      %cst_13 = arith.constant 0.000000e+00 : f32
      %16 = vector.broadcast %cst_13 : f32 to vector<16x256xf32>
      %17 = arith.maximumf %15, %16 : vector<16x256xf32>
      %18 = arith.truncf %17 : vector<16x256xf32> to vector<16x256xbf16>
      %c0_14 = arith.constant 0 : index
      %c0_15 = arith.constant 0 : index
      %19 = vector.load %arg5[%c0_14, %c0_15] : memref<256x256xbf16, #tpu.memory_space<vmem>>, vector<256x256xbf16>
      %cst_16 = arith.constant dense<0.000000e+00> : vector<16x256xf32>
      %20 = tpu.matmul %18, %19, %cst_16 {dimension_numbers = #tpu.dot_dimension_numbers<[1], [0], [0], [1], [0, 0, 1, 1], [], []>} : vector<16x256xbf16>, vector<256x256xbf16>, vector<16x256xf32> -> vector<16x256xf32>
      %c0_17 = arith.constant 0 : index
      %c0_18 = arith.constant 0 : index
      %21 = vector.load %arg6[%c0_17, %c0_18] : memref<1x256xf32, #tpu.memory_space<vmem>>, vector<1x256xf32>
      %22 = vector.broadcast %21 : vector<1x256xf32> to vector<16x256xf32>
      %23 = arith.addf %20, %22 : vector<16x256xf32>
      %cst_19 = arith.constant 0.000000e+00 : f32
      %24 = vector.broadcast %cst_19 : f32 to vector<16x256xf32>
      %25 = arith.maximumf %23, %24 : vector<16x256xf32>
      %26 = arith.truncf %25 : vector<16x256xf32> to vector<16x256xbf16>
      %c0_20 = arith.constant 0 : index
      %c0_21 = arith.constant 0 : index
      %27 = vector.load %arg7[%c0_20, %c0_21] : memref<256x256xbf16, #tpu.memory_space<vmem>>, vector<256x256xbf16>
      %cst_22 = arith.constant dense<0.000000e+00> : vector<16x256xf32>
      %28 = tpu.matmul %26, %27, %cst_22 {dimension_numbers = #tpu.dot_dimension_numbers<[1], [0], [0], [1], [0, 0, 1, 1], [], []>} : vector<16x256xbf16>, vector<256x256xbf16>, vector<16x256xf32> -> vector<16x256xf32>
      %c0_23 = arith.constant 0 : index
      %c0_24 = arith.constant 0 : index
      %29 = vector.load %arg8[%c0_23, %c0_24] : memref<1x256xf32, #tpu.memory_space<vmem>>, vector<1x256xf32>
      %30 = vector.broadcast %29 : vector<1x256xf32> to vector<16x256xf32>
      %31 = arith.addf %28, %30 : vector<16x256xf32>
      %32 = arith.addf %17, %31 : vector<16x256xf32>
      %cst_25 = arith.constant 0.000000e+00 : f32
      %33 = vector.broadcast %cst_25 : f32 to vector<16x256xf32>
      %34 = arith.maximumf %32, %33 : vector<16x256xf32>
      %35 = arith.truncf %34 : vector<16x256xf32> to vector<16x256xbf16>
      %c0_26 = arith.constant 0 : index
      %c0_27 = arith.constant 0 : index
      %36 = vector.load %arg9[%c0_26, %c0_27] : memref<256x256xbf16, #tpu.memory_space<vmem>>, vector<256x256xbf16>
      %cst_28 = arith.constant dense<0.000000e+00> : vector<16x256xf32>
      %37 = tpu.matmul %35, %36, %cst_28 {dimension_numbers = #tpu.dot_dimension_numbers<[1], [0], [0], [1], [0, 0, 1, 1], [], []>} : vector<16x256xbf16>, vector<256x256xbf16>, vector<16x256xf32> -> vector<16x256xf32>
      %c0_29 = arith.constant 0 : index
      %c0_30 = arith.constant 0 : index
      %38 = vector.load %arg10[%c0_29, %c0_30] : memref<1x256xf32, #tpu.memory_space<vmem>>, vector<1x256xf32>
      %39 = vector.broadcast %38 : vector<1x256xf32> to vector<16x256xf32>
      %40 = arith.addf %37, %39 : vector<16x256xf32>
      %cst_31 = arith.constant 0.000000e+00 : f32
      %41 = vector.broadcast %cst_31 : f32 to vector<16x256xf32>
      %42 = arith.maximumf %40, %41 : vector<16x256xf32>
      %43 = arith.truncf %42 : vector<16x256xf32> to vector<16x256xbf16>
      %c0_32 = arith.constant 0 : index
      %c0_33 = arith.constant 0 : index
      %44 = vector.load %arg11[%c0_32, %c0_33] : memref<256x256xbf16, #tpu.memory_space<vmem>>, vector<256x256xbf16>
      %cst_34 = arith.constant dense<0.000000e+00> : vector<16x256xf32>
      %45 = tpu.matmul %43, %44, %cst_34 {dimension_numbers = #tpu.dot_dimension_numbers<[1], [0], [0], [1], [0, 0, 1, 1], [], []>} : vector<16x256xbf16>, vector<256x256xbf16>, vector<16x256xf32> -> vector<16x256xf32>
      %c0_35 = arith.constant 0 : index
      %c0_36 = arith.constant 0 : index
      %46 = vector.load %arg12[%c0_35, %c0_36] : memref<1x256xf32, #tpu.memory_space<vmem>>, vector<1x256xf32>
      %47 = vector.broadcast %46 : vector<1x256xf32> to vector<16x256xf32>
      %48 = arith.addf %45, %47 : vector<16x256xf32>
      %49 = arith.addf %34, %48 : vector<16x256xf32>
      %cst_37 = arith.constant 0.000000e+00 : f32
      %50 = vector.broadcast %cst_37 : f32 to vector<16x256xf32>
      %51 = arith.maximumf %49, %50 : vector<16x256xf32>
      %52 = arith.truncf %51 : vector<16x256xf32> to vector<16x256xbf16>
      %c0_38 = arith.constant 0 : index
      %c0_39 = arith.constant 0 : index
      %53 = vector.load %arg13[%c0_38, %c0_39] : memref<256x256xbf16, #tpu.memory_space<vmem>>, vector<256x256xbf16>
      %cst_40 = arith.constant dense<0.000000e+00> : vector<16x256xf32>
      %54 = tpu.matmul %52, %53, %cst_40 {dimension_numbers = #tpu.dot_dimension_numbers<[1], [0], [0], [1], [0, 0, 1, 1], [], []>} : vector<16x256xbf16>, vector<256x256xbf16>, vector<16x256xf32> -> vector<16x256xf32>
      %c0_41 = arith.constant 0 : index
      %c0_42 = arith.constant 0 : index
      %55 = vector.load %arg14[%c0_41, %c0_42] : memref<1x256xf32, #tpu.memory_space<vmem>>, vector<1x256xf32>
      %56 = vector.broadcast %55 : vector<1x256xf32> to vector<16x256xf32>
      %57 = arith.addf %54, %56 : vector<16x256xf32>
      %c0_43 = arith.constant 0 : index
      %c0_44 = arith.constant 0 : index
      %58 = vector.load %arg15[%c0_43, %c0_44] : memref<16x256xf32, #tpu.memory_space<vmem>>, vector<16x256xf32>
      tpu.vector_store %arg15[%c0_43, %c0_44], %57 {strides = array<i32>} : memref<16x256xf32, #tpu.memory_space<vmem>>, vector<16x256xf32>,
    } else {
    }
    return
  }
  func.func @transform_0(%arg0: i32, %arg1: i32) -> (i32, i32) {
    %c0_i32 = arith.constant 0 : i32
    return %arg0, %arg1 : i32, i32
  }
  func.func @transform_1(%arg0: i32, %arg1: i32) -> (i32, i32) {
    %c0_i32 = arith.constant 0 : i32
    %c0_i32_0 = arith.constant 0 : i32
    return %arg1, %c0_i32 : i32, i32
  }
  func.func @transform_2(%arg0: i32, %arg1: i32) -> (i32, i32) {
    %c0_i32 = arith.constant 0 : i32
    %c0_i32_0 = arith.constant 0 : i32
    %c0_i32_1 = arith.constant 0 : i32
    return %c0_i32, %c0_i32_0 : i32, i32
  }
  func.func @transform_3(%arg0: i32, %arg1: i32) -> (i32, i32) {
    %c0_i32 = arith.constant 0 : i32
    %c0_i32_0 = arith.constant 0 : i32
    %c0_i32_1 = arith.constant 0 : i32
    return %c0_i32, %c0_i32_0 : i32, i32
  }
  func.func @transform_4(%arg0: i32, %arg1: i32) -> (i32, i32) {
    %c0_i32 = arith.constant 0 : i32
    %c0_i32_0 = arith.constant 0 : i32
    %c0_i32_1 = arith.constant 0 : i32
    return %c0_i32, %c0_i32_0 : i32, i32
  }
  func.func @transform_5(%arg0: i32, %arg1: i32) -> (i32, i32) {
    %c0_i32 = arith.constant 0 : i32
    %c0_i32_0 = arith.constant 0 : i32
    %c0_i32_1 = arith.constant 0 : i32
    return %c0_i32, %c0_i32_0 : i32, i32
  }
  func.func @transform_6(%arg0: i32, %arg1: i32) -> (i32, i32) {
    %c0_i32 = arith.constant 0 : i32
    %c0_i32_0 = arith.constant 0 : i32
    %c0_i32_1 = arith.constant 0 : i32
    return %c0_i32, %c0_i32_0 : i32, i32
  }
  func.func @transform_7(%arg0: i32, %arg1: i32) -> (i32, i32) {
    %c0_i32 = arith.constant 0 : i32
    %c0_i32_0 = arith.constant 0 : i32
    %c0_i32_1 = arith.constant 0 : i32
    return %c0_i32, %c0_i32_0 : i32, i32
  }
  func.func @transform_8(%arg0: i32, %arg1: i32) -> (i32, i32) {
    %c0_i32 = arith.constant 0 : i32
    %c0_i32_0 = arith.constant 0 : i32
    %c0_i32_1 = arith.constant 0 : i32
    return %c0_i32, %c0_i32_0 : i32, i32
  }
  func.func @transform_9(%arg0: i32, %arg1: i32) -> (i32, i32) {
    %c0_i32 = arith.constant 0 : i32
    %c0_i32_0 = arith.constant 0 : i32
    %c0_i32_1 = arith.constant 0 : i32
    return %c0_i32, %c0_i32_0 : i32, i32
  }
  func.func @transform_10(%arg0: i32, %arg1: i32) -> (i32, i32) {
    %c0_i32 = arith.constant 0 : i32
    %c0_i32_0 = arith.constant 0 : i32
    %c0_i32_1 = arith.constant 0 : i32
    return %c0_i32, %c0_i32_0 : i32, i32
  }
  func.func @transform_11(%arg0: i32, %arg1: i32) -> (i32, i32) {
    %c0_i32 = arith.constant 0 : i32
    %c0_i32_0 = arith.constant 0 : i32
    %c0_i32_1 = arith.constant 0 : i32
    return %c0_i32, %c0_i32_0 : i32, i32
  }
  func.func @transform_12(%arg0: i32, %arg1: i32) -> (i32, i32) {
    %c0_i32 = arith.constant 0 : i32
    %c0_i32_0 = arith.constant 0 : i32
    %c0_i32_1 = arith.constant 0 : i32
    return %c0_i32, %c0_i32_0 : i32, i32
  }
  func.func @transform_13(%arg0: i32, %arg1: i32) -> (i32, i32) {
    %c0_i32 = arith.constant 0 : i32
    %c0_i32_0 = arith.constant 0 : i32
    return %arg0, %c0_i32 : i32, i32
  }
}

</mosaic_0001>

<llo_original>
// kernel: tpu_custom_call.1
$region0: #{tpu_custom_call.1}
  #allocation0 [shape = 'u32[]', space=smem, size = 0x4, offset = 0x4, fixed_abs, tag = 'smem constant byte address 0x4 - core index']
  #allocation1 [shape = 'u32[72,128]{1,0:T(1,128)}', space=vmem, size = 0x9000, scoped, tag = 'internal scratch']
  #allocation2 [shape = 'f32[16,256]{1,0:T(8,128)}', space=vmem, size = 0x4000, scoped, tag = 'scratch operand']
  %s0 = inlined_call_operand.hbm [shape: bf16[16,384], index: 0, kind: input, shape index: {}]
  %s1 = inlined_call_operand.hbm [shape: bf16[384,256], index: 1, kind: input, shape index: {}]
  %s2 = inlined_call_operand.hbm [shape: f32[1,256], index: 2, kind: input, shape index: {}]
  %s3 = inlined_call_operand.hbm [shape: bf16[256,256], index: 3, kind: input, shape index: {}]
  %s4 = inlined_call_operand.vmem [shape: f32[1,256], index: 4, kind: input, shape index: {}]
  %s5 = inlined_call_operand.hbm [shape: bf16[256,256], index: 5, kind: input, shape index: {}]
  %s6 = inlined_call_operand.vmem [shape: f32[1,256], index: 6, kind: input, shape index: {}]
  %s7 = inlined_call_operand.hbm [shape: bf16[256,256], index: 7, kind: input, shape index: {}]
  %s8 = inlined_call_operand.vmem [shape: f32[1,256], index: 8, kind: input, shape index: {}]
  %s9 = inlined_call_operand.hbm [shape: bf16[256,256], index: 9, kind: input, shape index: {}]
  %s10 = inlined_call_operand.vmem [shape: f32[1,256], index: 10, kind: input, shape index: {}]
  %s11 = inlined_call_operand.hbm [shape: bf16[256,256], index: 11, kind: input, shape index: {}]
  %s12 = inlined_call_operand.vmem [shape: f32[1,256], index: 12, kind: input, shape index: {}]
  %s13 = inlined_call_operand.hbm [shape: f32[16,256], index: 13, kind: output, shape index: {}]
  %s14 = sld [smem:[#allocation0]]
  $region125: #{tpu_custom_call.1} parent=0
    _
  %s16 = ssub.s32 1, %s14
  %s17 = scalar_select 0, %s16, %s14
  $region1: #{tpu_custom_call.1} parent=0
    #allocation3 [shape = 'u8[8192]{0}', space=vmem, size = 0x2000, scoped, tag = 'input window, operand 0']
    #allocation4 [shape = 's32[2]{0}', space=sflag, size = 0x8, scoped, tag = 'scoped memory for tpu_custom_call.1']
    #allocation5 [shape = 's32[2]{0}', space=sflag, size = 0x8, scoped, tag = 'scoped memory for tpu_custom_call.1']
    #allocation6 [shape = 'u8[131072]{0}', space=vmem, size = 0x20000, scoped, tag = 'input window, operand 1']
    #allocation7 [shape = 's32[2]{0}', space=sflag, size = 0x8, scoped, tag = 'scoped memory for tpu_custom_call.1']
    #allocation8 [shape = 'u8[1024]{0}', space=vmem, size = 0x400, scoped, tag = 'input window, operand 2, single buffered']
    #allocation9 [shape = 'u8[131072]{0}', space=vmem, size = 0x20000, scoped, tag = 'input window, operand 3, single buffered']
    #allocation10 [shape = 's32[1]{0}', space=sflag, size = 0x4, scoped, tag = 'scoped memory for tpu_custom_call.1']
    #allocation11 [shape = 'u8[131072]{0}', space=vmem, size = 0x20000, scoped, tag = 'input window, operand 5, single buffered']
    #allocation12 [shape = 'u8[131072]{0}', space=vmem, size = 0x20000, scoped, tag = 'input window, operand 7, single buffered']
    #allocation13 [shape = 's32[1]{0}', space=sflag, size = 0x4, scoped, tag = 'scoped memory for tpu_custom_call.1']
    #allocation14 [shape = 'u8[131072]{0}', space=vmem, size = 0x20000, scoped, tag = 'input window, operand 9, single buffered']
    #allocation15 [shape = 'u8[131072]{0}', space=vmem, size = 0x20000, scoped, tag = 'input window, operand 11, single buffered']
    #allocation16 [shape = 's32[1]{0}', space=sflag, size = 0x4, scoped, tag = 'scoped memory for tpu_custom_call.1']
    #allocation17 [shape = 'u8[16384]{0}', space=vmem, size = 0x4000, scoped, tag = 'output window, operand 0, single buffered']
    %18 = vsyncpa [#allocation4], 0
    %s19 = scalar_lea.sflag [#allocation4], 1
    %20 = vsyncpa %s19, 0
    %21 = vsyncpa [#allocation7], 0
    %s22 = scalar_lea.sflag [#allocation7], 1
    %23 = vsyncpa %s22, 0
    %24 = vsyncpa [#allocation10], 0
    %25 = vsyncpa [#allocation13], 0
    %26 = vsyncpa [#allocation16], 0
    %27 = vsyncpa [#allocation5], 0
    loop: start=0, step=1, limit=5
    $region2: #{tpu_custom_call.1} parent=1 // loop_pre_header
      _
    $region3: #{tpu_custom_call.1} parent=1 // loop_header
      %s29 = sphi 0, %s33
      %p30 = scmp.ge.s32.totalorder %s29, 5
      %s36 = sphi 0, %s48
      %s37 = sphi 0, %s44
      %s38 = sphi 0, %s36
      %s39 = sphi 0, %s37
      %s40 = sphi 0, %s38
      %s41 = sphi 0, %s39
      %s53 = sphi 0, %s55
      %s56 = sphi 0, %s53
      %s57 = sphi 0, %s56
      %s73 = sphi 0, %s57
      %s79 = sphi 0, %s81
      %s82 = sphi 0, %s79
      %s83 = sphi 0, %s82
      %s99 = sphi 0, %s83
      %s103 = sphi 0, %s103
      %s105 = sphi 0, %s103
      %s106 = sphi 0, %s105
      %s120 = sphi 0, %s106
      %s124 = sphi 0, %s124
      %s126 = sphi 0, %s124
      %s127 = sphi 0, %s126
      %s141 = sphi 0, %s127
      %s145 = sphi 0, %s145
      %s147 = sphi 0, %s145
      %s148 = sphi 0, %s147
      %s162 = sphi 0, %s148
      %s166 = sphi 0, %s166
      %s168 = sphi 0, %s166
      %s169 = sphi 0, %s168
      %s183 = sphi 0, %s169
      %s187 = sphi 0, %s187
      %s189 = sphi 0, %s187
      %s190 = sphi 0, %s189
      %s204 = sphi 0, %s190
      %s208 = sphi 0, %s208
      %s210 = sphi 0, %s208
      %s211 = sphi 0, %s210
      %s225 = sphi 0, %s211
      %s229 = sphi 0, %s229
      %s231 = sphi 0, %s229
      %s232 = sphi 0, %s231
      %s246 = sphi 0, %s232
      %s250 = sphi 0, %s250
      %s252 = sphi 0, %s250
      %s253 = sphi 0, %s252
      %s267 = sphi 0, %s253
      %s271 = sphi 0, %s271
      %s273 = sphi 0, %s271
      %s274 = sphi 0, %s273
      %s288 = sphi 0, %s274
      %s292 = sphi 0, %s292
      %s294 = sphi 0, %s292
      %s295 = sphi 0, %s294
      %s309 = sphi 0, %s295
      %s313 = sphi 0, %s313
      %s315 = sphi 0, %s313
      %s316 = sphi 0, %s315
      %s330 = sphi 0, %s316
      %s336 = sphi 0, %s338
      %s339 = sphi 0, %s336
      %s340 = sphi 0, %s339
      %s356 = sphi 0, %s340
    $region4: #{tpu_custom_call.1} parent=1 // loop_header_branch
      %32 = sbr.rel (%p30) target = $region8
    $region5: #{tpu_custom_call.1} parent=1 // loop_body
      %s34 = ssub.s32 %s29, 1
      %s35 = ssub.s32 %s29, 2
      %s42 = sadd.s32 1, %s37
      %p43 = scmp.ge.s32.totalorder %s42, 3
      %s44 = scalar_select %p43, 0, %s42
      %s45 = sadd.s32 1, %s36
      %s46 = scalar_select %p43, %s45, %s36
      %p47 = scmp.ge.s32.totalorder %s46, 1
      %s48 = scalar_select %p47, 0, %s46
      %s49 = ssub.s32 %s36, %s48
      %s50 = ssub.s32 %s37, %s44
      %s51 = sor.u32 %s49, %s50
      %p52 = scmp.eq.s32.totalorder %s51, 0
      %s54 = sadd.s32 %s53, 1
      %s55 = scalar_select %p52, %s53, %s54
      %p58 = pneg %p52
      %p59 = scmp.eq.s32.totalorder %s29, 2
      %p60 = por %p58, %p59
      %p61 = scmp.ne.s32.totalorder %s53, %s56
      %p62 = scmp.eq.s32.totalorder %s29, 0
      %p63 = por %p61, %p62
      %p64 = scmp.ne.s32.totalorder %s53, %s56
      %p65 = scmp.eq.s32.totalorder %s34, 2
      %p66 = por %p64, %p65
      %p67 = scmp.ne.s32.totalorder %s56, %s57
      %p68 = scmp.eq.s32.totalorder %s34, 0
      %p69 = por %p67, %p68
      %p70 = scmp.ne.s32.totalorder %s56, %s57
      %p71 = scmp.eq.s32.totalorder %s35, 2
      %p72 = por %p70, %p71
      %p74 = scmp.ne.s32.totalorder %s57, %s73
      %p75 = scmp.eq.s32.totalorder %s35, 0
      %p76 = por %p74, %p75
      %s77 = ssub.s32 %s37, %s44
      %p78 = scmp.eq.s32.totalorder %s77, 0
      %s80 = sadd.s32 %s79, 1
      %s81 = scalar_select %p78, %s79, %s80
      %p84 = pneg %p78
      %p85 = scmp.eq.s32.totalorder %s29, 2
      %p86 = por %p84, %p85
      %p87 = scmp.ne.s32.totalorder %s79, %s82
      %p88 = scmp.eq.s32.totalorder %s29, 0
      %p89 = por %p87, %p88
      %p90 = scmp.ne.s32.totalorder %s79, %s82
      %p91 = scmp.eq.s32.totalorder %s34, 2
      %p92 = por %p90, %p91
      %p93 = scmp.ne.s32.totalorder %s82, %s83
      %p94 = scmp.eq.s32.totalorder %s34, 0
      %p95 = por %p93, %p94
      %p96 = scmp.ne.s32.totalorder %s82, %s83
      %p97 = scmp.eq.s32.totalorder %s35, 2
      %p98 = por %p96, %p97
      %p100 = scmp.ne.s32.totalorder %s83, %s99
      %p101 = scmp.eq.s32.totalorder %s35, 0
      %p102 = por %p100, %p101
      %s104 = sadd.s32 %s103, 1
      %p107 = scmp.eq.s32.totalorder %s29, 2
      %p108 = scmp.ne.s32.totalorder %s103, %s105
      %p109 = scmp.eq.s32.totalorder %s29, 0
      %p110 = por %p108, %p109
      %p111 = scmp.ne.s32.totalorder %s103, %s105
      %p112 = scmp.eq.s32.totalorder %s34, 2
      %p113 = por %p111, %p112
      %p114 = scmp.ne.s32.totalorder %s105, %s106
      %p115 = scmp.eq.s32.totalorder %s34, 0
      %p116 = por %p114, %p115
      %p117 = scmp.ne.s32.totalorder %s105, %s106
      %p118 = scmp.eq.s32.totalorder %s35, 2
      %p119 = por %p117, %p118
      %p121 = scmp.ne.s32.totalorder %s106, %s120
      %p122 = scmp.eq.s32.totalorder %s35, 0
      %p123 = por %p121, %p122
      %s125 = sadd.s32 %s124, 1
      %p128 = scmp.eq.s32.totalorder %s29, 2
      %p129 = scmp.ne.s32.totalorder %s124, %s126
      %p130 = scmp.eq.s32.totalorder %s29, 0
      %p131 = por %p129, %p130
      %p132 = scmp.ne.s32.totalorder %s124, %s126
      %p133 = scmp.eq.s32.totalorder %s34, 2
      %p134 = por %p132, %p133
      %p135 = scmp.ne.s32.totalorder %s126, %s127
      %p136 = scmp.eq.s32.totalorder %s34, 0
      %p137 = por %p135, %p136
      %p138 = scmp.ne.s32.totalorder %s126, %s127
      %p139 = scmp.eq.s32.totalorder %s35, 2
      %p140 = por %p138, %p139
      %p142 = scmp.ne.s32.totalorder %s127, %s141
      %p143 = scmp.eq.s32.totalorder %s35, 0
      %p144 = por %p142, %p143
      %s146 = sadd.s32 %s145, 1
      %p149 = scmp.eq.s32.totalorder %s29, 2
      %p150 = scmp.ne.s32.totalorder %s145, %s147
      %p151 = scmp.eq.s32.totalorder %s29, 0
      %p152 = por %p150, %p151
      %p153 = scmp.ne.s32.totalorder %s145, %s147
      %p154 = scmp.eq.s32.totalorder %s34, 2
      %p155 = por %p153, %p154
      %p156 = scmp.ne.s32.totalorder %s147, %s148
      %p157 = scmp.eq.s32.totalorder %s34, 0
      %p158 = por %p156, %p157
      %p159 = scmp.ne.s32.totalorder %s147, %s148
      %p160 = scmp.eq.s32.totalorder %s35, 2
      %p161 = por %p159, %p160
      %p163 = scmp.ne.s32.totalorder %s148, %s162
      %p164 = scmp.eq.s32.totalorder %s35, 0
      %p165 = por %p163, %p164
      %s167 = sadd.s32 %s166, 1
      %p170 = scmp.eq.s32.totalorder %s29, 2
      %p171 = scmp.ne.s32.totalorder %s166, %s168
      %p172 = scmp.eq.s32.totalorder %s29, 0
      %p173 = por %p171, %p172
      %p174 = scmp.ne.s32.totalorder %s166, %s168
      %p175 = scmp.eq.s32.totalorder %s34, 2
      %p176 = por %p174, %p175
      %p177 = scmp.ne.s32.totalorder %s168, %s169
      %p178 = scmp.eq.s32.totalorder %s34, 0
      %p179 = por %p177, %p178
      %p180 = scmp.ne.s32.totalorder %s168, %s169
      %p181 = scmp.eq.s32.totalorder %s35, 2
      %p182 = por %p180, %p181
      %p184 = scmp.ne.s32.totalorder %s169, %s183
      %p185 = scmp.eq.s32.totalorder %s35, 0
      %p186 = por %p184, %p185
      %s188 = sadd.s32 %s187, 1
      %p191 = scmp.eq.s32.totalorder %s29, 2
      %p192 = scmp.ne.s32.totalorder %s187, %s189
      %p193 = scmp.eq.s32.totalorder %s29, 0
      %p194 = por %p192, %p193
      %p195 = scmp.ne.s32.totalorder %s187, %s189
      %p196 = scmp.eq.s32.totalorder %s34, 2
      %p197 = por %p195, %p196
      %p198 = scmp.ne.s32.totalorder %s189, %s190
      %p199 = scmp.eq.s32.totalorder %s34, 0
      %p200 = por %p198, %p199
      %p201 = scmp.ne.s32.totalorder %s189, %s190
      %p202 = scmp.eq.s32.totalorder %s35, 2
      %p203 = por %p201, %p202
      %p205 = scmp.ne.s32.totalorder %s190, %s204
      %p206 = scmp.eq.s32.totalorder %s35, 0
      %p207 = por %p205, %p206
      %s209 = sadd.s32 %s208, 1
      %p212 = scmp.eq.s32.totalorder %s29, 2
      %p213 = scmp.ne.s32.totalorder %s208, %s210
      %p214 = scmp.eq.s32.totalorder %s29, 0
      %p215 = por %p213, %p214
      %p216 = scmp.ne.s32.totalorder %s208, %s210
      %p217 = scmp.eq.s32.totalorder %s34, 2
      %p218 = por %p216, %p217
      %p219 = scmp.ne.s32.totalorder %s210, %s211
      %p220 = scmp.eq.s32.totalorder %s34, 0
      %p221 = por %p219, %p220
      %p222 = scmp.ne.s32.totalorder %s210, %s211
      %p223 = scmp.eq.s32.totalorder %s35, 2
      %p224 = por %p222, %p223
      %p226 = scmp.ne.s32.totalorder %s211, %s225
      %p227 = scmp.eq.s32.totalorder %s35, 0
      %p228 = por %p226, %p227
      %s230 = sadd.s32 %s229, 1
      %p233 = scmp.eq.s32.totalorder %s29, 2
      %p234 = scmp.ne.s32.totalorder %s229, %s231
      %p235 = scmp.eq.s32.totalorder %s29, 0
      %p236 = por %p234, %p235
      %p237 = scmp.ne.s32.totalorder %s229, %s231
      %p238 = scmp.eq.s32.totalorder %s34, 2
      %p239 = por %p237, %p238
      %p240 = scmp.ne.s32.totalorder %s231, %s232
      %p241 = scmp.eq.s32.totalorder %s34, 0
      %p242 = por %p240, %p241
      %p243 = scmp.ne.s32.totalorder %s231, %s232
      %p244 = scmp.eq.s32.totalorder %s35, 2
      %p245 = por %p243, %p244
      %p247 = scmp.ne.s32.totalorder %s232, %s246
      %p248 = scmp.eq.s32.totalorder %s35, 0
      %p249 = por %p247, %p248
      %s251 = sadd.s32 %s250, 1
      %p254 = scmp.eq.s32.totalorder %s29, 2
      %p255 = scmp.ne.s32.totalorder %s250, %s252
      %p256 = scmp.eq.s32.totalorder %s29, 0
      %p257 = por %p255, %p256
      %p258 = scmp.ne.s32.totalorder %s250, %s252
      %p259 = scmp.eq.s32.totalorder %s34, 2
      %p260 = por %p258, %p259
      %p261 = scmp.ne.s32.totalorder %s252, %s253
      %p262 = scmp.eq.s32.totalorder %s34, 0
      %p263 = por %p261, %p262
      %p264 = scmp.ne.s32.totalorder %s252, %s253
      %p265 = scmp.eq.s32.totalorder %s35, 2
      %p266 = por %p264, %p265
      %p268 = scmp.ne.s32.totalorder %s253, %s267
      %p269 = scmp.eq.s32.totalorder %s35, 0
      %p270 = por %p268, %p269
      %s272 = sadd.s32 %s271, 1
      %p275 = scmp.eq.s32.totalorder %s29, 2
      %p276 = scmp.ne.s32.totalorder %s271, %s273
      %p277 = scmp.eq.s32.totalorder %s29, 0
      %p278 = por %p276, %p277
      %p279 = scmp.ne.s32.totalorder %s271, %s273
      %p280 = scmp.eq.s32.totalorder %s34, 2
      %p281 = por %p279, %p280
      %p282 = scmp.ne.s32.totalorder %s273, %s274
      %p283 = scmp.eq.s32.totalorder %s34, 0
      %p284 = por %p282, %p283
      %p285 = scmp.ne.s32.totalorder %s273, %s274
      %p286 = scmp.eq.s32.totalorder %s35, 2
      %p287 = por %p285, %p286
      %p289 = scmp.ne.s32.totalorder %s274, %s288
      %p290 = scmp.eq.s32.totalorder %s35, 0
      %p291 = por %p289, %p290
      %s293 = sadd.s32 %s292, 1
      %p296 = scmp.eq.s32.totalorder %s29, 2
      %p297 = scmp.ne.s32.totalorder %s292, %s294
      %p298 = scmp.eq.s32.totalorder %s29, 0
      %p299 = por %p297, %p298
      %p300 = scmp.ne.s32.totalorder %s292, %s294
      %p301 = scmp.eq.s32.totalorder %s34, 2
      %p302 = por %p300, %p301
      %p303 = scmp.ne.s32.totalorder %s294, %s295
      %p304 = scmp.eq.s32.totalorder %s34, 0
      %p305 = por %p303, %p304
      %p306 = scmp.ne.s32.totalorder %s294, %s295
      %p307 = scmp.eq.s32.totalorder %s35, 2
      %p308 = por %p306, %p307
      %p310 = scmp.ne.s32.totalorder %s295, %s309
      %p311 = scmp.eq.s32.totalorder %s35, 0
      %p312 = por %p310, %p311
      %s314 = sadd.s32 %s313, 1
      %p317 = scmp.eq.s32.totalorder %s29, 2
      %p318 = scmp.ne.s32.totalorder %s313, %s315
      %p319 = scmp.eq.s32.totalorder %s29, 0
      %p320 = por %p318, %p319
      %p321 = scmp.ne.s32.totalorder %s313, %s315
      %p322 = scmp.eq.s32.totalorder %s34, 2
      %p323 = por %p321, %p322
      %p324 = scmp.ne.s32.totalorder %s315, %s316
      %p325 = scmp.eq.s32.totalorder %s34, 0
      %p326 = por %p324, %p325
      %p327 = scmp.ne.s32.totalorder %s315, %s316
      %p328 = scmp.eq.s32.totalorder %s35, 2
      %p329 = por %p327, %p328
      %p331 = scmp.ne.s32.totalorder %s316, %s330
      %p332 = scmp.eq.s32.totalorder %s35, 0
      %p333 = por %p331, %p332
      %s334 = ssub.s32 %s36, %s48
      %p335 = scmp.eq.s32.totalorder %s334, 0
      %s337 = sadd.s32 %s336, 1
      %s338 = scalar_select %p335, %s336, %s337
      %p341 = pneg %p335
      %p342 = scmp.eq.s32.totalorder %s29, 2
      %p343 = por %p341, %p342
      %p344 = scmp.ne.s32.totalorder %s336, %s339
      %p345 = scmp.eq.s32.totalorder %s29, 0
      %p346 = por %p344, %p345
      %p347 = scmp.ne.s32.totalorder %s336, %s339
      %p348 = scmp.eq.s32.totalorder %s34, 2
      %p349 = por %p347, %p348
      %p350 = scmp.ne.s32.totalorder %s339, %s340
      %p351 = scmp.eq.s32.totalorder %s34, 0
      %p352 = por %p350, %p351
      %p353 = scmp.ne.s32.totalorder %s339, %s340
      %p354 = scmp.eq.s32.totalorder %s35, 2
      %p355 = por %p353, %p354
      %p357 = scmp.ne.s32.totalorder %s340, %s356
      %p358 = scmp.eq.s32.totalorder %s35, 0
      %p359 = por %p357, %p358
      %p360 = scmp.le.s32.totalorder 1, %s29
      %p361 = scmp.lt.s32.totalorder %s29, 4
      %p362 = pnand %p360, %p361
      %p363 = pneg %p362
      // Predicated region
      $region9: #{tpu_custom_call.1} parent=5 // pred_check
        _
      $region10: #{tpu_custom_call.1} parent=5 // pred_check_branch
        %365 = sbr.rel (%p362) target = $region12
      $region11: #{tpu_custom_call.1} parent=5 // pred_region
        %s366 = ssub.s32 %s29, 1
        // Predicated region
        $region13: #{tpu_custom_call.1} parent=11 // pred_check
          %p367 = pneg %p116
        $region14: #{tpu_custom_call.1} parent=11 // pred_check_branch
          %369 = sbr.rel (%p367) target = $region16
        $region15: #{tpu_custom_call.1} parent=11 // pred_region
          %371 = vsyncadd [#allocation7], 0
          %s373 = sshll.u32 %s2, 4
          %s374 = int_to_ptr.hbm [resolvable:$true] %s373
          %s375 = sshll.u32 [#allocation8], 4
          %s376 = int_to_ptr.vmem [resolvable:$true] %s375
          %378 = dma.hbm_to_vmem [thread:$0]  %s374, 32, %s376, [#allocation7]
        $region16: #{tpu_custom_call.1} parent=11 // pred_fallthru
          _
        // Predicated region
        $region17: #{tpu_custom_call.1} parent=11 // pred_check
          %p379 = pneg %p137
        $region18: #{tpu_custom_call.1} parent=11 // pred_check_branch
          %381 = sbr.rel (%p379) target = $region20
        $region19: #{tpu_custom_call.1} parent=11 // pred_region
          %383 = vsyncadd [#allocation10], 0
          %s384 = sshll.u32 %s3, 4
          %s385 = int_to_ptr.hbm [resolvable:$true] %s384
          %s386 = sshll.u32 [#allocation9], 4
          %s387 = int_to_ptr.vmem [resolvable:$true] %s386
          %392 = dma.hbm_to_vmem [thread:$0]  %s385, 4096, %s387, [#allocation10], 128, 128, 8
        $region20: #{tpu_custom_call.1} parent=11 // pred_fallthru
          _
        // Predicated region
        $region21: #{tpu_custom_call.1} parent=11 // pred_check
          %p393 = pneg %p158
        $region22: #{tpu_custom_call.1} parent=11 // pred_check_branch
          %395 = sbr.rel (%p393) target = $region24
        $region23: #{tpu_custom_call.1} parent=11 // pred_region
          _
        $region24: #{tpu_custom_call.1} parent=11 // pred_fallthru
          _
        // Predicated region
        $region25: #{tpu_custom_call.1} parent=11 // pred_check
          %p396 = pneg %p179
        $region26: #{tpu_custom_call.1} parent=11 // pred_check_branch
          %398 = sbr.rel (%p396) target = $region28
        $region27: #{tpu_custom_call.1} parent=11 // pred_region
          %400 = vsyncadd [#allocation10], 0
          %s401 = sshll.u32 %s5, 4
          %s402 = int_to_ptr.hbm [resolvable:$true] %s401
          %s403 = sshll.u32 [#allocation11], 4
          %s404 = int_to_ptr.vmem [resolvable:$true] %s403
          %409 = dma.hbm_to_vmem [thread:$0]  %s402, 4096, %s404, [#allocation10], 128, 128, 8
        $region28: #{tpu_custom_call.1} parent=11 // pred_fallthru
          _
        // Predicated region
        $region29: #{tpu_custom_call.1} parent=11 // pred_check
          %p410 = pneg %p200
        $region30: #{tpu_custom_call.1} parent=11 // pred_check_branch
          %412 = sbr.rel (%p410) target = $region32
        $region31: #{tpu_custom_call.1} parent=11 // pred_region
          _
        $region32: #{tpu_custom_call.1} parent=11 // pred_fallthru
          _
        // Predicated region
        $region33: #{tpu_custom_call.1} parent=11 // pred_check
          %p413 = pneg %p221
        $region34: #{tpu_custom_call.1} parent=11 // pred_check_branch
          %415 = sbr.rel (%p413) target = $region36
        $region35: #{tpu_custom_call.1} parent=11 // pred_region
          %417 = vsyncadd [#allocation13], 0
          %s418 = sshll.u32 %s7, 4
          %s419 = int_to_ptr.hbm [resolvable:$true] %s418
          %s420 = sshll.u32 [#allocation12], 4
          %s421 = int_to_ptr.vmem [resolvable:$true] %s420
          %426 = dma.hbm_to_vmem [thread:$0]  %s419, 4096, %s421, [#allocation13], 128, 128, 8
        $region36: #{tpu_custom_call.1} parent=11 // pred_fallthru
          _
        // Predicated region
        $region37: #{tpu_custom_call.1} parent=11 // pred_check
          %p427 = pneg %p242
        $region38: #{tpu_custom_call.1} parent=11 // pred_check_branch
          %429 = sbr.rel (%p427) target = $region40
        $region39: #{tpu_custom_call.1} parent=11 // pred_region
          _
        $region40: #{tpu_custom_call.1} parent=11 // pred_fallthru
          _
        // Predicated region
        $region41: #{tpu_custom_call.1} parent=11 // pred_check
          %p430 = pneg %p263
        $region42: #{tpu_custom_call.1} parent=11 // pred_check_branch
          %432 = sbr.rel (%p430) target = $region44
        $region43: #{tpu_custom_call.1} parent=11 // pred_region
          %434 = vsyncadd [#allocation13], 0
          %s435 = sshll.u32 %s9, 4
          %s436 = int_to_ptr.hbm [resolvable:$true] %s435
          %s437 = sshll.u32 [#allocation14], 4
          %s438 = int_to_ptr.vmem [resolvable:$true] %s437
          %443 = dma.hbm_to_vmem [thread:$0]  %s436, 4096, %s438, [#allocation13], 128, 128, 8
        $region44: #{tpu_custom_call.1} parent=11 // pred_fallthru
          _
        // Predicated region
        $region45: #{tpu_custom_call.1} parent=11 // pred_check
          %p444 = pneg %p284
        $region46: #{tpu_custom_call.1} parent=11 // pred_check_branch
          %446 = sbr.rel (%p444) target = $region48
        $region47: #{tpu_custom_call.1} parent=11 // pred_region
          _
        $region48: #{tpu_custom_call.1} parent=11 // pred_fallthru
          _
        // Predicated region
        $region49: #{tpu_custom_call.1} parent=11 // pred_check
          %p447 = pneg %p305
        $region50: #{tpu_custom_call.1} parent=11 // pred_check_branch
          %449 = sbr.rel (%p447) target = $region52
        $region51: #{tpu_custom_call.1} parent=11 // pred_region
          %451 = vsyncadd [#allocation16], 0
          %s452 = sshll.u32 %s11, 4
          %s453 = int_to_ptr.hbm [resolvable:$true] %s452
          %s454 = sshll.u32 [#allocation15], 4
          %s455 = int_to_ptr.vmem [resolvable:$true] %s454
          %460 = dma.hbm_to_vmem [thread:$0]  %s453, 4096, %s455, [#allocation16], 128, 128, 8
        $region52: #{tpu_custom_call.1} parent=11 // pred_fallthru
          _
        // Predicated region
        $region53: #{tpu_custom_call.1} parent=11 // pred_check
          %p461 = pneg %p326
        $region54: #{tpu_custom_call.1} parent=11 // pred_check_branch
          %463 = sbr.rel (%p461) target = $region56
        $region55: #{tpu_custom_call.1} parent=11 // pred_region
          _
        $region56: #{tpu_custom_call.1} parent=11 // pred_fallthru
          _
      $region12: #{tpu_custom_call.1} parent=5 // pred_fallthru
        _
      %p464 = scmp.lt.s32.totalorder %s29, 3
      // Predicated region
      $region57: #{tpu_custom_call.1} parent=5 // pred_check
        %p465 = pneg %p464
      $region58: #{tpu_custom_call.1} parent=5 // pred_check_branch
        %467 = sbr.rel (%p465) target = $region60
      $region59: #{tpu_custom_call.1} parent=5 // pred_region
        // Predicated region
        $region61: #{tpu_custom_call.1} parent=59 // pred_check
          %p468 = pneg %p63
        $region62: #{tpu_custom_call.1} parent=59 // pred_check_branch
          %470 = sbr.rel (%p468) target = $region64
        $region63: #{tpu_custom_call.1} parent=59 // pred_region
          %s471 = sand.u32 %s53, 1
          %s472 = scalar_lea.sflag [#allocation4], %s471
          %s473 = sand.u32 %s53, 1
          %s474 = smul.addr %s473, 8
          %s475 = scalar_lea.vmem [#allocation3], %s474
          %s476 = smul.u32 2, %s36
          %478 = vsyncadd %s472, 0
          %s479 = smul.addr %s476, 3
          %s480 = sadd.s32 %s37, %s479
          %s481 = smul.addr %s480, 4
          %s482 = scalar_lea.hbm %s0, %s481
          %s483 = sshll.u32 %s482, 4
          %s484 = int_to_ptr.hbm [resolvable:$true] %s483
          %s485 = sshll.u32 %s475, 4
          %s486 = int_to_ptr.vmem [resolvable:$true] %s485
          %491 = dma.hbm_to_vmem [thread:$0]  %s484, 128, %s486, %s472, 192, 64, 4
        $region64: #{tpu_custom_call.1} parent=59 // pred_fallthru
          _
        // Predicated region
        $region65: #{tpu_custom_call.1} parent=59 // pred_check
          %p492 = pneg %p89
        $region66: #{tpu_custom_call.1} parent=59 // pred_check_branch
          %494 = sbr.rel (%p492) target = $region68
        $region67: #{tpu_custom_call.1} parent=59 // pred_region
          %s495 = sand.u32 %s29, 1
          %s496 = scalar_lea.sflag [#allocation7], %s495
          %s497 = sand.u32 %s79, 1
          %s498 = smul.addr %s497, 128
          %s499 = scalar_lea.vmem [#allocation6], %s498
          %s500 = smul.u32 16, %s37
          %502 = vsyncadd %s496, 0
          %s503 = smul.addr %s500, 2
          %s504 = smul.addr %s503, 4
          %s505 = scalar_lea.hbm %s1, %s504
          %s506 = sshll.u32 %s505, 4
          %s507 = int_to_ptr.hbm [resolvable:$true] %s506
          %s508 = sshll.u32 %s499, 4
          %s509 = int_to_ptr.vmem [resolvable:$true] %s508
          %514 = dma.hbm_to_vmem [thread:$0]  %s507, 2048, %s509, %s496, 128, 128, 8
        $region68: #{tpu_custom_call.1} parent=59 // pred_fallthru
          _
      $region60: #{tpu_custom_call.1} parent=5 // pred_fallthru
        _
      %p515 = scmp.le.s32.totalorder 1, %s29
      %p516 = scmp.lt.s32.totalorder %s29, 4
      %p517 = pnand %p515, %p516
      %p518 = pneg %p517
      // Predicated region
      $region69: #{tpu_custom_call.1} parent=5 // pred_check
        _
      $region70: #{tpu_custom_call.1} parent=5 // pred_check_branch
        %520 = sbr.rel (%p517) target = $region72
      $region71: #{tpu_custom_call.1} parent=5 // pred_region
        %s521 = ssub.s32 %s29, 1
        %s522 = sand.u32 %s56, 1
        %s523 = scalar_lea.sflag [#allocation4], %s522
        %s524 = sand.u32 %s56, 1
        %s525 = smul.addr %s524, 8
        %s526 = scalar_lea.vmem [#allocation3], %s525
        // Predicated region
        $region73: #{tpu_custom_call.1} parent=71 // pred_check
          %p527 = pneg %p69
        $region74: #{tpu_custom_call.1} parent=71 // pred_check_branch
          %529 = sbr.rel (%p527) target = $region76
        $region75: #{tpu_custom_call.1} parent=71 // pred_region
          %531 = dma.done %s523, 128
        $region76: #{tpu_custom_call.1} parent=71 // pred_fallthru
          _
        %s532 = sand.u32 %s34, 1
        %s533 = scalar_lea.sflag [#allocation7], %s532
        %s534 = sand.u32 %s82, 1
        %s535 = smul.addr %s534, 128
        %s536 = scalar_lea.vmem [#allocation6], %s535
        // Predicated region
        $region77: #{tpu_custom_call.1} parent=71 // pred_check
          %p537 = pneg %p95
        $region78: #{tpu_custom_call.1} parent=71 // pred_check_branch
          %539 = sbr.rel (%p537) target = $region80
        $region79: #{tpu_custom_call.1} parent=71 // pred_region
          %541 = dma.done %s533, 2048
        $region80: #{tpu_custom_call.1} parent=71 // pred_fallthru
          _
        // Predicated region
        $region81: #{tpu_custom_call.1} parent=71 // pred_check
          %p542 = pneg %p116
        $region82: #{tpu_custom_call.1} parent=71 // pred_check_branch
          %544 = sbr.rel (%p542) target = $region84
        $region83: #{tpu_custom_call.1} parent=71 // pred_region
          %546 = dma.done [#allocation7], 32
        $region84: #{tpu_custom_call.1} parent=71 // pred_fallthru
          _
        // Predicated region
        $region85: #{tpu_custom_call.1} parent=71 // pred_check
          %p547 = pneg %p137
        $region86: #{tpu_custom_call.1} parent=71 // pred_check_branch
          %549 = sbr.rel (%p547) target = $region88
        $region87: #{tpu_custom_call.1} parent=71 // pred_region
          %551 = dma.done [#allocation10], 4096
        $region88: #{tpu_custom_call.1} parent=71 // pred_fallthru
          _
        // Predicated region
        $region89: #{tpu_custom_call.1} parent=71 // pred_check
          %p552 = pneg %p179
        $region90: #{tpu_custom_call.1} parent=71 // pred_check_branch
          %554 = sbr.rel (%p552) target = $region92
        $region91: #{tpu_custom_call.1} parent=71 // pred_region
          %556 = dma.done [#allocation10], 4096
        $region92: #{tpu_custom_call.1} parent=71 // pred_fallthru
          _
        // Predicated region
        $region93: #{tpu_custom_call.1} parent=71 // pred_check
          %p557 = pneg %p221
        $region94: #{tpu_custom_call.1} parent=71 // pred_check_branch
          %559 = sbr.rel (%p557) target = $region96
        $region95: #{tpu_custom_call.1} parent=71 // pred_region
          %561 = dma.done [#allocation13], 4096
        $region96: #{tpu_custom_call.1} parent=71 // pred_fallthru
          _
        // Predicated region
        $region97: #{tpu_custom_call.1} parent=71 // pred_check
          %p562 = pneg %p263
        $region98: #{tpu_custom_call.1} parent=71 // pred_check_branch
          %564 = sbr.rel (%p562) target = $region100
        $region99: #{tpu_custom_call.1} parent=71 // pred_region
          %566 = dma.done [#allocation13], 4096
        $region100: #{tpu_custom_call.1} parent=71 // pred_fallthru
          _
        // Predicated region
        $region101: #{tpu_custom_call.1} parent=71 // pred_check
          %p567 = pneg %p305
        $region102: #{tpu_custom_call.1} parent=71 // pred_check_branch
          %569 = sbr.rel (%p567) target = $region104
        $region103: #{tpu_custom_call.1} parent=71 // pred_region
          %571 = dma.done [#allocation16], 4096
        $region104: #{tpu_custom_call.1} parent=71 // pred_fallthru
          _
        %s572 = sand.u32 %s56, 1
        %s573 = scalar_lea.sflag [#allocation4], %s572
        %s574 = sand.u32 %s56, 1
        %s575 = smul.addr %s574, 8
        %s576 = scalar_lea.vmem [#allocation3], %s575
        %p577 = pneg %p69
        %p578 = pneg %p66
        %s579 = sand.u32 %s34, 1
        %s580 = scalar_lea.sflag [#allocation7], %s579
        %s581 = sand.u32 %s82, 1
        %s582 = smul.addr %s581, 128
        %s583 = scalar_lea.vmem [#allocation6], %s582
        %p584 = pneg %p95
        %p585 = pneg %p92
        %p586 = pneg %p116
        %p587 = pneg %p113
        %p588 = pneg %p137
        %p589 = pneg %p134
        %p590 = pneg %p158
        %p591 = pneg %p155
        %p592 = pneg %p179
        %p593 = pneg %p176
        %p594 = pneg %p200
        %p595 = pneg %p197
        %p596 = pneg %p221
        %p597 = pneg %p218
        %p598 = pneg %p242
        %p599 = pneg %p239
        %p600 = pneg %p263
        %p601 = pneg %p260
        %p602 = pneg %p284
        %p603 = pneg %p281
        %p604 = pneg %p305
        %p605 = pneg %p302
        %p606 = pneg %p326
        %p607 = pneg %p323
        %p608 = pneg %p352
        %p609 = pneg %p349
        %s610 = smul.u32 2, %s38
        %s611 = smul.u32 16, %s39
        %s612 = smul.u32 2, %s38
        %p613 = scmp.eq.s32.totalorder %s39, 0
        // Predicated region
        $region105: #{tpu_custom_call.1} parent=71 // pred_check
          %p614 = pneg %p613
        $region106: #{tpu_custom_call.1} parent=71 // pred_check_branch
          %616 = sbr.rel (%p614) target = $region108
        $region107: #{tpu_custom_call.1} parent=71 // pred_region
          %617 = vst [vmem:[#allocation2] sm:$0xff] 0.0
          %618 = vst [vmem:[#allocation2 + $0x8] sm:$0xff] 0.0
          %619 = vst [vmem:[#allocation2 + $0x10] sm:$0xff] 0.0
          %620 = vst [vmem:[#allocation2 + $0x18] sm:$0xff] 0.0
        $region108: #{tpu_custom_call.1} parent=71 // pred_fallthru
          _
        %v621 = vld [vmem:[#allocation2] sm:$0xff]
        %v622 = vld [vmem:[#allocation2 + $0x8] sm:$0xff]
        %v623 = vld [vmem:[#allocation2 + $0x10] sm:$0xff]
        %v624 = vld [vmem:[#allocation2 + $0x18] sm:$0xff]
        %v625 = vld [vmem:[%s526] sm:$0xf]
        %v626 = vld [vmem:[%s526 + $0x4] sm:$0xf]
        %v627 = vld [vmem:[%s536] sm:$0xff]
        %v628 = vld [vmem:[%s536 + $0x8] sm:$0xff]
        %v629 = vld [vmem:[%s536 + $0x10] sm:$0xff]
        %v630 = vld [vmem:[%s536 + $0x18] sm:$0xff]
        %v631 = vld [vmem:[%s536 + $0x20] sm:$0xff]
        %v632 = vld [vmem:[%s536 + $0x28] sm:$0xff]
        %v633 = vld [vmem:[%s536 + $0x30] sm:$0xff]
        %v634 = vld [vmem:[%s536 + $0x38] sm:$0xff]
        %v635 = vld [vmem:[%s536 + $0x40] sm:$0xff]
        %v636 = vld [vmem:[%s536 + $0x48] sm:$0xff]
        %v637 = vld [vmem:[%s536 + $0x50] sm:$0xff]
        %v638 = vld [vmem:[%s536 + $0x58] sm:$0xff]
        %v639 = vld [vmem:[%s536 + $0x60] sm:$0xff]
        %v640 = vld [vmem:[%s536 + $0x68] sm:$0xff]
        %v641 = vld [vmem:[%s536 + $0x70] sm:$0xff]
        %v642 = vld [vmem:[%s536 + $0x78] sm:$0xff]
        %v645 = vunpack.c.l.b16 %v625
        %v646 = vunpack.c.l.b16 %v626
        %v647 = vpack.c.b16 %v646, %v645
        %v665 = vunpack.c.l.b16 %v627
        %v666 = vunpack.c.h.b16 %v627
        %v667 = vunpack.c.l.b16 %v628
        %v668 = vunpack.c.h.b16 %v628
        %v669 = vunpack.c.l.b16 %v629
        %v670 = vunpack.c.h.b16 %v629
        %v671 = vunpack.c.l.b16 %v630
        %v672 = vunpack.c.h.b16 %v630
        %v673 = vunpack.c.l.b16 %v631
        %v674 = vunpack.c.h.b16 %v631
        %v675 = vunpack.c.l.b16 %v632
        %v676 = vunpack.c.h.b16 %v632
        %v677 = vunpack.c.l.b16 %v633
        %v678 = vunpack.c.h.b16 %v633
        %v679 = vunpack.c.l.b16 %v634
        %v680 = vunpack.c.h.b16 %v634
        %v681 = vunpack.c.l.b16 %v635
        %v682 = vunpack.c.h.b16 %v635
        %v683 = vunpack.c.l.b16 %v636
        %v684 = vunpack.c.h.b16 %v636
        %v685 = vunpack.c.l.b16 %v637
        %v686 = vunpack.c.h.b16 %v637
        %v687 = vunpack.c.l.b16 %v638
        %v688 = vunpack.c.h.b16 %v638
        %v689 = vunpack.c.l.b16 %v639
        %v690 = vunpack.c.h.b16 %v639
        %v691 = vunpack.c.l.b16 %v640
        %v692 = vunpack.c.h.b16 %v640
        %v693 = vunpack.c.l.b16 %v641
        %v694 = vunpack.c.h.b16 %v641
        %v695 = vunpack.c.l.b16 %v642
        %v696 = vunpack.c.h.b16 %v642
        %v697 = vpack.c.b16 %v667, %v665
        %v698 = vpack.c.b16 %v668, %v666
        %v699 = vpack.c.b16 %v671, %v669
        %v700 = vpack.c.b16 %v672, %v670
        %v701 = vpack.c.b16 %v675, %v673
        %v702 = vpack.c.b16 %v676, %v674
        %v703 = vpack.c.b16 %v679, %v677
        %v704 = vpack.c.b16 %v680, %v678
        %v705 = vpack.c.b16 %v683, %v681
        %v706 = vpack.c.b16 %v684, %v682
        %v707 = vpack.c.b16 %v687, %v685
        %v708 = vpack.c.b16 %v688, %v686
        %v709 = vpack.c.b16 %v691, %v689
        %v710 = vpack.c.b16 %v692, %v690
        %v711 = vpack.c.b16 %v695, %v693
        %v712 = vpack.c.b16 %v696, %v694
        %729 = vmatpush.bf16.msra.mxu0 %v711
        %730 = vmatpush.bf16.msra.mxu0 %v709
        %731 = vmatpush.bf16.msra.mxu0 %v707
        %732 = vmatpush.bf16.msra.mxu0 %v705
        %733 = vmatpush.bf16.msra.mxu0 %v703
        %734 = vmatpush.bf16.msra.mxu0 %v701
        %735 = vmatpush.bf16.msra.mxu0 %v699
        %736 = vmatpush.bf16.msra.mxu0 %v697
        %737 = vmatmul.bf16.gmra.mxu0 %v647
        %v738 = vpop.f32.mrf.mxu0
        %v739 = vadd.f32 0.0, %v738
        %v740 = vpop.f32.mrf.mxu0
        %v741 = vadd.f32 0.0, %v740
        %742 = vdwg.mxu0
        %743 = vmatpush.bf16.msra.mxu0 %v712
        %744 = vmatpush.bf16.msra.mxu0 %v710
        %745 = vmatpush.bf16.msra.mxu0 %v708
        %746 = vmatpush.bf16.msra.mxu0 %v706
        %747 = vmatpush.bf16.msra.mxu0 %v704
        %748 = vmatpush.bf16.msra.mxu0 %v702
        %749 = vmatpush.bf16.msra.mxu0 %v700
        %750 = vmatpush.bf16.msra.mxu0 %v698
        %751 = vmatmul.bf16.gmra.mxu0 %v647
        %v752 = vpop.f32.mrf.mxu0
        %v753 = vadd.f32 0.0, %v752
        %v754 = vpop.f32.mrf.mxu0
        %v755 = vadd.f32 0.0, %v754
        %756 = vdwg.mxu0
        %v757 = vadd.f32 %v621, %v739
        %v758 = vadd.f32 %v622, %v753
        %v759 = vadd.f32 %v623, %v741
        %v760 = vadd.f32 %v624, %v755
        %761 = vst [vmem:[#allocation2] sm:$0xff] %v757
        %762 = vst [vmem:[#allocation2 + $0x8] sm:$0xff] %v758
        %763 = vst [vmem:[#allocation2 + $0x10] sm:$0xff] %v759
        %764 = vst [vmem:[#allocation2 + $0x18] sm:$0xff] %v760
        %p765 = scmp.eq.s32.totalorder %s39, 2
        // Predicated region
        $region109: #{tpu_custom_call.1} parent=71 // pred_check
          %p766 = pneg %p765
        $region110: #{tpu_custom_call.1} parent=71 // pred_check_branch
          %768 = sbr.rel (%p766) target = $region112
        $region111: #{tpu_custom_call.1} parent=71 // pred_region
          %v769 = vld [vmem:[#allocation2] sm:$0xff]
          %v770 = vld [vmem:[#allocation2 + $0x8] sm:$0xff]
          %v771 = vld [vmem:[#allocation2 + $0x10] sm:$0xff]
          %v772 = vld [vmem:[#allocation2 + $0x18] sm:$0xff]
          %v773 = vld [vmem:[#allocation8] sm:$0x3]
          %v775 = vperm.slane %v773, 0
          %v776 = vperm.slane %v773, 1
          %v779 = vadd.f32 %v769, %v775
          %v780 = vadd.f32 %v770, %v776
          %v781 = vadd.f32 %v771, %v775
          %v782 = vadd.f32 %v772, %v776
          %v783 = vmax.f32 %v779, 0.0
          %v784 = vmax.f32 %v780, 0.0
          %v785 = vmax.f32 %v781, 0.0
          %v786 = vmax.f32 %v782, 0.0
          %v787 = vpack.c.bf16 %v785, %v783
          %v788 = vpack.c.bf16 %v786, %v784
          %v789 = vld [vmem:[#allocation9] sm:$0xff]
          %v790 = vld [vmem:[#allocation9 + $0x8] sm:$0xff]
          %v791 = vld [vmem:[#allocation9 + $0x10] sm:$0xff]
          %v792 = vld [vmem:[#allocation9 + $0x18] sm:$0xff]
          %v793 = vld [vmem:[#allocation9 + $0x20] sm:$0xff]
          %v794 = vld [vmem:[#allocation9 + $0x28] sm:$0xff]
          %v795 = vld [vmem:[#allocation9 + $0x30] sm:$0xff]
          %v796 = vld [vmem:[#allocation9 + $0x38] sm:$0xff]
          %v797 = vld [vmem:[#allocation9 + $0x40] sm:$0xff]
          %v798 = vld [vmem:[#allocation9 + $0x48] sm:$0xff]
          %v799 = vld [vmem:[#allocation9 + $0x50] sm:$0xff]
          %v800 = vld [vmem:[#allocation9 + $0x58] sm:$0xff]
          %v801 = vld [vmem:[#allocation9 + $0x60] sm:$0xff]
          %v802 = vld [vmem:[#allocation9 + $0x68] sm:$0xff]
          %v803 = vld [vmem:[#allocation9 + $0x70] sm:$0xff]
          %v804 = vld [vmem:[#allocation9 + $0x78] sm:$0xff]
          %v805 = vld [vmem:[#allocation9 + $0x80] sm:$0xff]
          %v806 = vld [vmem:[#allocation9 + $0x88] sm:$0xff]
          %v807 = vld [vmem:[#allocation9 + $0x90] sm:$0xff]
          %v808 = vld [vmem:[#allocation9 + $0x98] sm:$0xff]
          %v809 = vld [vmem:[#allocation9 + $0xa0] sm:$0xff]
          %v810 = vld [vmem:[#allocation9 + $0xa8] sm:$0xff]
          %v811 = vld [vmem:[#allocation9 + $0xb0] sm:$0xff]
          %v812 = vld [vmem:[#allocation9 + $0xb8] sm:$0xff]
          %v813 = vld [vmem:[#allocation9 + $0xc0] sm:$0xff]
          %v814 = vld [vmem:[#allocation9 + $0xc8] sm:$0xff]
          %v815 = vld [vmem:[#allocation9 + $0xd0] sm:$0xff]
          %v816 = vld [vmem:[#allocation9 + $0xd8] sm:$0xff]
          %v817 = vld [vmem:[#allocation9 + $0xe0] sm:$0xff]
          %v818 = vld [vmem:[#allocation9 + $0xe8] sm:$0xff]
          %v819 = vld [vmem:[#allocation9 + $0xf0] sm:$0xff]
          %v820 = vld [vmem:[#allocation9 + $0xf8] sm:$0xff]
          %v821 = vld [vmem:[%s4] sm:$0x3]
          %v823 = vperm.slane %v821, 0
          %v824 = vperm.slane %v821, 1
          %v859 = vunpack.c.l.b16 %v789
          %v860 = vunpack.c.h.b16 %v789
          %v861 = vunpack.c.l.b16 %v790
          %v862 = vunpack.c.h.b16 %v790
          %v863 = vunpack.c.l.b16 %v791
          %v864 = vunpack.c.h.b16 %v791
          %v865 = vunpack.c.l.b16 %v792
          %v866 = vunpack.c.h.b16 %v792
          %v867 = vunpack.c.l.b16 %v793
          %v868 = vunpack.c.h.b16 %v793
          %v869 = vunpack.c.l.b16 %v794
          %v870 = vunpack.c.h.b16 %v794
          %v871 = vunpack.c.l.b16 %v795
          %v872 = vunpack.c.h.b16 %v795
          %v873 = vunpack.c.l.b16 %v796
          %v874 = vunpack.c.h.b16 %v796
          %v875 = vunpack.c.l.b16 %v797
          %v876 = vunpack.c.h.b16 %v797
          %v877 = vunpack.c.l.b16 %v798
          %v878 = vunpack.c.h.b16 %v798
          %v879 = vunpack.c.l.b16 %v799
          %v880 = vunpack.c.h.b16 %v799
          %v881 = vunpack.c.l.b16 %v800
          %v882 = vunpack.c.h.b16 %v800
          %v883 = vunpack.c.l.b16 %v801
          %v884 = vunpack.c.h.b16 %v801
          %v885 = vunpack.c.l.b16 %v802
          %v886 = vunpack.c.h.b16 %v802
          %v887 = vunpack.c.l.b16 %v803
          %v888 = vunpack.c.h.b16 %v803
          %v889 = vunpack.c.l.b16 %v804
          %v890 = vunpack.c.h.b16 %v804
          %v891 = vunpack.c.l.b16 %v805
          %v892 = vunpack.c.h.b16 %v805
          %v893 = vunpack.c.l.b16 %v806
          %v894 = vunpack.c.h.b16 %v806
          %v895 = vunpack.c.l.b16 %v807
          %v896 = vunpack.c.h.b16 %v807
          %v897 = vunpack.c.l.b16 %v808
          %v898 = vunpack.c.h.b16 %v808
          %v899 = vunpack.c.l.b16 %v809
          %v900 = vunpack.c.h.b16 %v809
          %v901 = vunpack.c.l.b16 %v810
          %v902 = vunpack.c.h.b16 %v810
          %v903 = vunpack.c.l.b16 %v811
          %v904 = vunpack.c.h.b16 %v811
          %v905 = vunpack.c.l.b16 %v812
          %v906 = vunpack.c.h.b16 %v812
          %v907 = vunpack.c.l.b16 %v813
          %v908 = vunpack.c.h.b16 %v813
          %v909 = vunpack.c.l.b16 %v814
          %v910 = vunpack.c.h.b16 %v814
          %v911 = vunpack.c.l.b16 %v815
          %v912 = vunpack.c.h.b16 %v815
          %v913 = vunpack.c.l.b16 %v816
          %v914 = vunpack.c.h.b16 %v816
          %v915 = vunpack.c.l.b16 %v817
          %v916 = vunpack.c.h.b16 %v817
          %v917 = vunpack.c.l.b16 %v818
          %v918 = vunpack.c.h.b16 %v818
          %v919 = vunpack.c.l.b16 %v819
          %v920 = vunpack.c.h.b16 %v819
          %v921 = vunpack.c.l.b16 %v820
          %v922 = vunpack.c.h.b16 %v820
          %v923 = vpack.c.b16 %v861, %v859
          %v924 = vpack.c.b16 %v862, %v860
          %v925 = vpack.c.b16 %v865, %v863
          %v926 = vpack.c.b16 %v866, %v864
          %v927 = vpack.c.b16 %v869, %v867
          %v928 = vpack.c.b16 %v870, %v868
          %v929 = vpack.c.b16 %v873, %v871
          %v930 = vpack.c.b16 %v874, %v872
          %v931 = vpack.c.b16 %v877, %v875
          %v932 = vpack.c.b16 %v878, %v876
          %v933 = vpack.c.b16 %v881, %v879
          %v934 = vpack.c.b16 %v882, %v880
          %v935 = vpack.c.b16 %v885, %v883
          %v936 = vpack.c.b16 %v886, %v884
          %v937 = vpack.c.b16 %v889, %v887
          %v938 = vpack.c.b16 %v890, %v888
          %v939 = vpack.c.b16 %v893, %v891
          %v940 = vpack.c.b16 %v894, %v892
          %v941 = vpack.c.b16 %v897, %v895
          %v942 = vpack.c.b16 %v898, %v896
          %v943 = vpack.c.b16 %v901, %v899
          %v944 = vpack.c.b16 %v902, %v900
          %v945 = vpack.c.b16 %v905, %v903
          %v946 = vpack.c.b16 %v906, %v904
          %v947 = vpack.c.b16 %v909, %v907
          %v948 = vpack.c.b16 %v910, %v908
          %v949 = vpack.c.b16 %v913, %v911
          %v950 = vpack.c.b16 %v914, %v912
          %v951 = vpack.c.b16 %v917, %v915
          %v952 = vpack.c.b16 %v918, %v916
          %v953 = vpack.c.b16 %v921, %v919
          %v954 = vpack.c.b16 %v922, %v920
          %987 = vmatpush.bf16.msra.mxu0 %v937
          %988 = vmatpush.bf16.msra.mxu0 %v935
          %989 = vmatpush.bf16.msra.mxu0 %v933
          %990 = vmatpush.bf16.msra.mxu0 %v931
          %991 = vmatpush.bf16.msra.mxu0 %v929
          %992 = vmatpush.bf16.msra.mxu0 %v927
          %993 = vmatpush.bf16.msra.mxu0 %v925
          %994 = vmatpush.bf16.msra.mxu0 %v923
          %995 = vmatmul.bf16.gmra.mxu0 %v787
          %v996 = vpop.f32.mrf.mxu0
          %v997 = vadd.f32 %v823, %v996
          %v998 = vpop.f32.mrf.mxu0
          %v999 = vadd.f32 %v823, %v998
          %1000 = vdwg.mxu0
          %1001 = vmatpush.bf16.msra.mxu0 %v953
          %1002 = vmatpush.bf16.msra.mxu0 %v951
          %1003 = vmatpush.bf16.msra.mxu0 %v949
          %1004 = vmatpush.bf16.msra.mxu0 %v947
          %1005 = vmatpush.bf16.msra.mxu0 %v945
          %1006 = vmatpush.bf16.msra.mxu0 %v943
          %1007 = vmatpush.bf16.msra.mxu0 %v941
          %1008 = vmatpush.bf16.msra.mxu0 %v939
          %1009 = vmatmul.bf16.gmra.mxu0 %v788
          %v1010 = vpop.f32.mrf.mxu0
          %v1011 = vadd.f32 %v997, %v1010
          %v1012 = vpop.f32.mrf.mxu0
          %v1013 = vadd.f32 %v999, %v1012
          %1014 = vdwg.mxu0
          %1015 = vmatpush.bf16.msra.mxu0 %v938
          %1016 = vmatpush.bf16.msra.mxu0 %v936
          %1017 = vmatpush.bf16.msra.mxu0 %v934
          %1018 = vmatpush.bf16.msra.mxu0 %v932
          %1019 = vmatpush.bf16.msra.mxu0 %v930
          %1020 = vmatpush.bf16.msra.mxu0 %v928
          %1021 = vmatpush.bf16.msra.mxu0 %v926
          %1022 = vmatpush.bf16.msra.mxu0 %v924
          %1023 = vmatmul.bf16.gmra.mxu0 %v787
          %v1024 = vpop.f32.mrf.mxu0
          %v1025 = vadd.f32 %v824, %v1024
          %v1026 = vpop.f32.mrf.mxu0
          %v1027 = vadd.f32 %v824, %v1026
          %1028 = vdwg.mxu0
          %1029 = vmatpush.bf16.msra.mxu0 %v954
          %1030 = vmatpush.bf16.msra.mxu0 %v952
          %1031 = vmatpush.bf16.msra.mxu0 %v950
          %1032 = vmatpush.bf16.msra.mxu0 %v948
          %1033 = vmatpush.bf16.msra.mxu0 %v946
          %1034 = vmatpush.bf16.msra.mxu0 %v944
          %1035 = vmatpush.bf16.msra.mxu0 %v942
          %1036 = vmatpush.bf16.msra.mxu0 %v940
          %1037 = vmatmul.bf16.gmra.mxu0 %v788
          %v1038 = vpop.f32.mrf.mxu0
          %v1039 = vadd.f32 %v1025, %v1038
          %v1040 = vpop.f32.mrf.mxu0
          %v1041 = vadd.f32 %v1027, %v1040
          %1042 = vdwg.mxu0
          %v1043 = vmax.f32 %v1011, 0.0
          %v1044 = vmax.f32 %v1039, 0.0
          %v1045 = vmax.f32 %v1013, 0.0
          %v1046 = vmax.f32 %v1041, 0.0
          %v1047 = vpack.c.bf16 %v1045, %v1043
          %v1048 = vpack.c.bf16 %v1046, %v1044
          %v1049 = vld [vmem:[#allocation11] sm:$0xff]
          %v1050 = vld [vmem:[#allocation11 + $0x8] sm:$0xff]
          %v1051 = vld [vmem:[#allocation11 + $0x10] sm:$0xff]
          %v1052 = vld [vmem:[#allocation11 + $0x18] sm:$0xff]
          %v1053 = vld [vmem:[#allocation11 + $0x20] sm:$0xff]
          %v1054 = vld [vmem:[#allocation11 + $0x28] sm:$0xff]
          %v1055 = vld [vmem:[#allocation11 + $0x30] sm:$0xff]
          %v1056 = vld [vmem:[#allocation11 + $0x38] sm:$0xff]
          %v1057 = vld [vmem:[#allocation11 + $0x40] sm:$0xff]
          %v1058 = vld [vmem:[#allocation11 + $0x48] sm:$0xff]
          %v1059 = vld [vmem:[#allocation11 + $0x50] sm:$0xff]
          %v1060 = vld [vmem:[#allocation11 + $0x58] sm:$0xff]
          %v1061 = vld [vmem:[#allocation11 + $0x60] sm:$0xff]
          %v1062 = vld [vmem:[#allocation11 + $0x68] sm:$0xff]
          %v1063 = vld [vmem:[#allocation11 + $0x70] sm:$0xff]
          %v1064 = vld [vmem:[#allocation11 + $0x78] sm:$0xff]
          %v1065 = vld [vmem:[#allocation11 + $0x80] sm:$0xff]
          %v1066 = vld [vmem:[#allocation11 + $0x88] sm:$0xff]
          %v1067 = vld [vmem:[#allocation11 + $0x90] sm:$0xff]
          %v1068 = vld [vmem:[#allocation11 + $0x98] sm:$0xff]
          %v1069 = vld [vmem:[#allocation11 + $0xa0] sm:$0xff]
          %v1070 = vld [vmem:[#allocation11 + $0xa8] sm:$0xff]
          %v1071 = vld [vmem:[#allocation11 + $0xb0] sm:$0xff]
          %v1072 = vld [vmem:[#allocation11 + $0xb8] sm:$0xff]
          %v1073 = vld [vmem:[#allocation11 + $0xc0] sm:$0xff]
          %v1074 = vld [vmem:[#allocation11 + $0xc8] sm:$0xff]
          %v1075 = vld [vmem:[#allocation11 + $0xd0] sm:$0xff]
          %v1076 = vld [vmem:[#allocation11 + $0xd8] sm:$0xff]
          %v1077 = vld [vmem:[#allocation11 + $0xe0] sm:$0xff]
          %v1078 = vld [vmem:[#allocation11 + $0xe8] sm:$0xff]
          %v1079 = vld [vmem:[#allocation11 + $0xf0] sm:$0xff]
          %v1080 = vld [vmem:[#allocation11 + $0xf8] sm:$0xff]
          %v1081 = vld [vmem:[%s6] sm:$0x3]
          %v1083 = vperm.slane %v1081, 0
          %v1084 = vperm.slane %v1081, 1
          %v1119 = vunpack.c.l.b16 %v1049
          %v1120 = vunpack.c.h.b16 %v1049
          %v1121 = vunpack.c.l.b16 %v1050
          %v1122 = vunpack.c.h.b16 %v1050
          %v1123 = vunpack.c.l.b16 %v1051
          %v1124 = vunpack.c.h.b16 %v1051
          %v1125 = vunpack.c.l.b16 %v1052
          %v1126 = vunpack.c.h.b16 %v1052
          %v1127 = vunpack.c.l.b16 %v1053
          %v1128 = vunpack.c.h.b16 %v1053
          %v1129 = vunpack.c.l.b16 %v1054
          %v1130 = vunpack.c.h.b16 %v1054
          %v1131 = vunpack.c.l.b16 %v1055
          %v1132 = vunpack.c.h.b16 %v1055
          %v1133 = vunpack.c.l.b16 %v1056
          %v1134 = vunpack.c.h.b16 %v1056
          %v1135 = vunpack.c.l.b16 %v1057
          %v1136 = vunpack.c.h.b16 %v1057
          %v1137 = vunpack.c.l.b16 %v1058
          %v1138 = vunpack.c.h.b16 %v1058
          %v1139 = vunpack.c.l.b16 %v1059
          %v1140 = vunpack.c.h.b16 %v1059
          %v1141 = vunpack.c.l.b16 %v1060
          %v1142 = vunpack.c.h.b16 %v1060
          %v1143 = vunpack.c.l.b16 %v1061
          %v1144 = vunpack.c.h.b16 %v1061
          %v1145 = vunpack.c.l.b16 %v1062
          %v1146 = vunpack.c.h.b16 %v1062
          %v1147 = vunpack.c.l.b16 %v1063
          %v1148 = vunpack.c.h.b16 %v1063
          %v1149 = vunpack.c.l.b16 %v1064
          %v1150 = vunpack.c.h.b16 %v1064
          %v1151 = vunpack.c.l.b16 %v1065
          %v1152 = vunpack.c.h.b16 %v1065
          %v1153 = vunpack.c.l.b16 %v1066
          %v1154 = vunpack.c.h.b16 %v1066
          %v1155 = vunpack.c.l.b16 %v1067
          %v1156 = vunpack.c.h.b16 %v1067
          %v1157 = vunpack.c.l.b16 %v1068
          %v1158 = vunpack.c.h.b16 %v1068
          %v1159 = vunpack.c.l.b16 %v1069
          %v1160 = vunpack.c.h.b16 %v1069
          %v1161 = vunpack.c.l.b16 %v1070
          %v1162 = vunpack.c.h.b16 %v1070
          %v1163 = vunpack.c.l.b16 %v1071
          %v1164 = vunpack.c.h.b16 %v1071
          %v1165 = vunpack.c.l.b16 %v1072
          %v1166 = vunpack.c.h.b16 %v1072
          %v1167 = vunpack.c.l.b16 %v1073
          %v1168 = vunpack.c.h.b16 %v1073
          %v1169 = vunpack.c.l.b16 %v1074
          %v1170 = vunpack.c.h.b16 %v1074
          %v1171 = vunpack.c.l.b16 %v1075
          %v1172 = vunpack.c.h.b16 %v1075
          %v1173 = vunpack.c.l.b16 %v1076
          %v1174 = vunpack.c.h.b16 %v1076
          %v1175 = vunpack.c.l.b16 %v1077
          %v1176 = vunpack.c.h.b16 %v1077
          %v1177 = vunpack.c.l.b16 %v1078
          %v1178 = vunpack.c.h.b16 %v1078
          %v1179 = vunpack.c.l.b16 %v1079
          %v1180 = vunpack.c.h.b16 %v1079
          %v1181 = vunpack.c.l.b16 %v1080
          %v1182 = vunpack.c.h.b16 %v1080
          %v1183 = vpack.c.b16 %v1121, %v1119
          %v1184 = vpack.c.b16 %v1122, %v1120
          %v1185 = vpack.c.b16 %v1125, %v1123
          %v1186 = vpack.c.b16 %v1126, %v1124
          %v1187 = vpack.c.b16 %v1129, %v1127
          %v1188 = vpack.c.b16 %v1130, %v1128
          %v1189 = vpack.c.b16 %v1133, %v1131
          %v1190 = vpack.c.b16 %v1134, %v1132
          %v1191 = vpack.c.b16 %v1137, %v1135
          %v1192 = vpack.c.b16 %v1138, %v1136
          %v1193 = vpack.c.b16 %v1141, %v1139
          %v1194 = vpack.c.b16 %v1142, %v1140
          %v1195 = vpack.c.b16 %v1145, %v1143
          %v1196 = vpack.c.b16 %v1146, %v1144
          %v1197 = vpack.c.b16 %v1149, %v1147
          %v1198 = vpack.c.b16 %v1150, %v1148
          %v1199 = vpack.c.b16 %v1153, %v1151
          %v1200 = vpack.c.b16 %v1154, %v1152
          %v1201 = vpack.c.b16 %v1157, %v1155
          %v1202 = vpack.c.b16 %v1158, %v1156
          %v1203 = vpack.c.b16 %v1161, %v1159
          %v1204 = vpack.c.b16 %v1162, %v1160
          %v1205 = vpack.c.b16 %v1165, %v1163
          %v1206 = vpack.c.b16 %v1166, %v1164
          %v1207 = vpack.c.b16 %v1169, %v1167
          %v1208 = vpack.c.b16 %v1170, %v1168
          %v1209 = vpack.c.b16 %v1173, %v1171
          %v1210 = vpack.c.b16 %v1174, %v1172
          %v1211 = vpack.c.b16 %v1177, %v1175
          %v1212 = vpack.c.b16 %v1178, %v1176
          %v1213 = vpack.c.b16 %v1181, %v1179
          %v1214 = vpack.c.b16 %v1182, %v1180
          %1247 = vmatpush.bf16.msra.mxu0 %v1197
          %1248 = vmatpush.bf16.msra.mxu0 %v1195
          %1249 = vmatpush.bf16.msra.mxu0 %v1193
          %1250 = vmatpush.bf16.msra.mxu0 %v1191
          %1251 = vmatpush.bf16.msra.mxu0 %v1189
          %1252 = vmatpush.bf16.msra.mxu0 %v1187
          %1253 = vmatpush.bf16.msra.mxu0 %v1185
          %1254 = vmatpush.bf16.msra.mxu0 %v1183
          %1255 = vmatmul.bf16.gmra.mxu0 %v1047
          %v1256 = vpop.f32.mrf.mxu0
          %v1257 = vadd.f32 %v1083, %v1256
          %v1258 = vpop.f32.mrf.mxu0
          %v1259 = vadd.f32 %v1083, %v1258
          %1260 = vdwg.mxu0
          %1261 = vmatpush.bf16.msra.mxu0 %v1213
          %1262 = vmatpush.bf16.msra.mxu0 %v1211
          %1263 = vmatpush.bf16.msra.mxu0 %v1209
          %1264 = vmatpush.bf16.msra.mxu0 %v1207
          %1265 = vmatpush.bf16.msra.mxu0 %v1205
          %1266 = vmatpush.bf16.msra.mxu0 %v1203
          %1267 = vmatpush.bf16.msra.mxu0 %v1201
          %1268 = vmatpush.bf16.msra.mxu0 %v1199
          %1269 = vmatmul.bf16.gmra.mxu0 %v1048
          %v1270 = vpop.f32.mrf.mxu0
          %v1271 = vadd.f32 %v1257, %v1270
          %v1272 = vpop.f32.mrf.mxu0
          %v1273 = vadd.f32 %v1259, %v1272
          %1274 = vdwg.mxu0
          %1275 = vmatpush.bf16.msra.mxu0 %v1198
          %1276 = vmatpush.bf16.msra.mxu0 %v1196
          %1277 = vmatpush.bf16.msra.mxu0 %v1194
          %1278 = vmatpush.bf16.msra.mxu0 %v1192
          %1279 = vmatpush.bf16.msra.mxu0 %v1190
          %1280 = vmatpush.bf16.msra.mxu0 %v1188
          %1281 = vmatpush.bf16.msra.mxu0 %v1186
          %1282 = vmatpush.bf16.msra.mxu0 %v1184
          %1283 = vmatmul.bf16.gmra.mxu0 %v1047
          %v1284 = vpop.f32.mrf.mxu0
          %v1285 = vadd.f32 %v1084, %v1284
          %v1286 = vpop.f32.mrf.mxu0
          %v1287 = vadd.f32 %v1084, %v1286
          %1288 = vdwg.mxu0
          %1289 = vmatpush.bf16.msra.mxu0 %v1214
          %1290 = vmatpush.bf16.msra.mxu0 %v1212
          %1291 = vmatpush.bf16.msra.mxu0 %v1210
          %1292 = vmatpush.bf16.msra.mxu0 %v1208
          %1293 = vmatpush.bf16.msra.mxu0 %v1206
          %1294 = vmatpush.bf16.msra.mxu0 %v1204
          %1295 = vmatpush.bf16.msra.mxu0 %v1202
          %1296 = vmatpush.bf16.msra.mxu0 %v1200
          %1297 = vmatmul.bf16.gmra.mxu0 %v1048
          %v1298 = vpop.f32.mrf.mxu0
          %v1299 = vadd.f32 %v1285, %v1298
          %v1300 = vpop.f32.mrf.mxu0
          %v1301 = vadd.f32 %v1287, %v1300
          %1302 = vdwg.mxu0
          %v1303 = vadd.f32 %v783, %v1271
          %v1304 = vadd.f32 %v784, %v1299
          %v1305 = vadd.f32 %v785, %v1273
          %v1306 = vadd.f32 %v786, %v1301
          %v1307 = vmax.f32 %v1303, 0.0
          %v1308 = vmax.f32 %v1304, 0.0
          %v1309 = vmax.f32 %v1305, 0.0
          %v1310 = vmax.f32 %v1306, 0.0
          %v1311 = vpack.c.bf16 %v1309, %v1307
          %v1312 = vpack.c.bf16 %v1310, %v1308
          %v1313 = vld [vmem:[#allocation12] sm:$0xff]
          %v1314 = vld [vmem:[#allocation12 + $0x8] sm:$0xff]
          %v1315 = vld [vmem:[#allocation12 + $0x10] sm:$0xff]
          %v1316 = vld [vmem:[#allocation12 + $0x18] sm:$0xff]
          %v1317 = vld [vmem:[#allocation12 + $0x20] sm:$0xff]
          %v1318 = vld [vmem:[#allocation12 + $0x28] sm:$0xff]
          %v1319 = vld [vmem:[#allocation12 + $0x30] sm:$0xff]
          %v1320 = vld [vmem:[#allocation12 + $0x38] sm:$0xff]
          %v1321 = vld [vmem:[#allocation12 + $0x40] sm:$0xff]
          %v1322 = vld [vmem:[#allocation12 + $0x48] sm:$0xff]
          %v1323 = vld [vmem:[#allocation12 + $0x50] sm:$0xff]
          %v1324 = vld [vmem:[#allocation12 + $0x58] sm:$0xff]
          %v1325 = vld [vmem:[#allocation12 + $0x60] sm:$0xff]
          %v1326 = vld [vmem:[#allocation12 + $0x68] sm:$0xff]
          %v1327 = vld [vmem:[#allocation12 + $0x70] sm:$0xff]
          %v1328 = vld [vmem:[#allocation12 + $0x78] sm:$0xff]
          %v1329 = vld [vmem:[#allocation12 + $0x80] sm:$0xff]
          %v1330 = vld [vmem:[#allocation12 + $0x88] sm:$0xff]
          %v1331 = vld [vmem:[#allocation12 + $0x90] sm:$0xff]
          %v1332 = vld [vmem:[#allocation12 + $0x98] sm:$0xff]
          %v1333 = vld [vmem:[#allocation12 + $0xa0] sm:$0xff]
          %v1334 = vld [vmem:[#allocation12 + $0xa8] sm:$0xff]
          %v1335 = vld [vmem:[#allocation12 + $0xb0] sm:$0xff]
          %v1336 = vld [vmem:[#allocation12 + $0xb8] sm:$0xff]
          %v1337 = vld [vmem:[#allocation12 + $0xc0] sm:$0xff]
          %v1338 = vld [vmem:[#allocation12 + $0xc8] sm:$0xff]
          %v1339 = vld [vmem:[#allocation12 + $0xd0] sm:$0xff]
          %v1340 = vld [vmem:[#allocation12 + $0xd8] sm:$0xff]
          %v1341 = vld [vmem:[#allocation12 + $0xe0] sm:$0xff]
          %v1342 = vld [vmem:[#allocation12 + $0xe8] sm:$0xff]
          %v1343 = vld [vmem:[#allocation12 + $0xf0] sm:$0xff]
          %v1344 = vld [vmem:[#allocation12 + $0xf8] sm:$0xff]
          %v1345 = vld [vmem:[%s8] sm:$0x3]
          %v1347 = vperm.slane %v1345, 0
          %v1348 = vperm.slane %v1345, 1
          %v1383 = vunpack.c.l.b16 %v1313
          %v1384 = vunpack.c.h.b16 %v1313
          %v1385 = vunpack.c.l.b16 %v1314
          %v1386 = vunpack.c.h.b16 %v1314
          %v1387 = vunpack.c.l.b16 %v1315
          %v1388 = vunpack.c.h.b16 %v1315
          %v1389 = vunpack.c.l.b16 %v1316
          %v1390 = vunpack.c.h.b16 %v1316
          %v1391 = vunpack.c.l.b16 %v1317
          %v1392 = vunpack.c.h.b16 %v1317
          %v1393 = vunpack.c.l.b16 %v1318
          %v1394 = vunpack.c.h.b16 %v1318
          %v1395 = vunpack.c.l.b16 %v1319
          %v1396 = vunpack.c.h.b16 %v1319
          %v1397 = vunpack.c.l.b16 %v1320
          %v1398 = vunpack.c.h.b16 %v1320
          %v1399 = vunpack.c.l.b16 %v1321
          %v1400 = vunpack.c.h.b16 %v1321
          %v1401 = vunpack.c.l.b16 %v1322
          %v1402 = vunpack.c.h.b16 %v1322
          %v1403 = vunpack.c.l.b16 %v1323
          %v1404 = vunpack.c.h.b16 %v1323
          %v1405 = vunpack.c.l.b16 %v1324
          %v1406 = vunpack.c.h.b16 %v1324
          %v1407 = vunpack.c.l.b16 %v1325
          %v1408 = vunpack.c.h.b16 %v1325
          %v1409 = vunpack.c.l.b16 %v1326
          %v1410 = vunpack.c.h.b16 %v1326
          %v1411 = vunpack.c.l.b16 %v1327
          %v1412 = vunpack.c.h.b16 %v1327
          %v1413 = vunpack.c.l.b16 %v1328
          %v1414 = vunpack.c.h.b16 %v1328
          %v1415 = vunpack.c.l.b16 %v1329
          %v1416 = vunpack.c.h.b16 %v1329
          %v1417 = vunpack.c.l.b16 %v1330
          %v1418 = vunpack.c.h.b16 %v1330
          %v1419 = vunpack.c.l.b16 %v1331
          %v1420 = vunpack.c.h.b16 %v1331
          %v1421 = vunpack.c.l.b16 %v1332
          %v1422 = vunpack.c.h.b16 %v1332
          %v1423 = vunpack.c.l.b16 %v1333
          %v1424 = vunpack.c.h.b16 %v1333
          %v1425 = vunpack.c.l.b16 %v1334
          %v1426 = vunpack.c.h.b16 %v1334
          %v1427 = vunpack.c.l.b16 %v1335
          %v1428 = vunpack.c.h.b16 %v1335
          %v1429 = vunpack.c.l.b16 %v1336
          %v1430 = vunpack.c.h.b16 %v1336
          %v1431 = vunpack.c.l.b16 %v1337
          %v1432 = vunpack.c.h.b16 %v1337
          %v1433 = vunpack.c.l.b16 %v1338
          %v1434 = vunpack.c.h.b16 %v1338
          %v1435 = vunpack.c.l.b16 %v1339
          %v1436 = vunpack.c.h.b16 %v1339
          %v1437 = vunpack.c.l.b16 %v1340
          %v1438 = vunpack.c.h.b16 %v1340
          %v1439 = vunpack.c.l.b16 %v1341
          %v1440 = vunpack.c.h.b16 %v1341
          %v1441 = vunpack.c.l.b16 %v1342
          %v1442 = vunpack.c.h.b16 %v1342
          %v1443 = vunpack.c.l.b16 %v1343
          %v1444 = vunpack.c.h.b16 %v1343
          %v1445 = vunpack.c.l.b16 %v1344
          %v1446 = vunpack.c.h.b16 %v1344
          %v1447 = vpack.c.b16 %v1385, %v1383
          %v1448 = vpack.c.b16 %v1386, %v1384
          %v1449 = vpack.c.b16 %v1389, %v1387
          %v1450 = vpack.c.b16 %v1390, %v1388
          %v1451 = vpack.c.b16 %v1393, %v1391
          %v1452 = vpack.c.b16 %v1394, %v1392
          %v1453 = vpack.c.b16 %v1397, %v1395
          %v1454 = vpack.c.b16 %v1398, %v1396
          %v1455 = vpack.c.b16 %v1401, %v1399
          %v1456 = vpack.c.b16 %v1402, %v1400
          %v1457 = vpack.c.b16 %v1405, %v1403
          %v1458 = vpack.c.b16 %v1406, %v1404
          %v1459 = vpack.c.b16 %v1409, %v1407
          %v1460 = vpack.c.b16 %v1410, %v1408
          %v1461 = vpack.c.b16 %v1413, %v1411
          %v1462 = vpack.c.b16 %v1414, %v1412
          %v1463 = vpack.c.b16 %v1417, %v1415
          %v1464 = vpack.c.b16 %v1418, %v1416
          %v1465 = vpack.c.b16 %v1421, %v1419
          %v1466 = vpack.c.b16 %v1422, %v1420
          %v1467 = vpack.c.b16 %v1425, %v1423
          %v1468 = vpack.c.b16 %v1426, %v1424
          %v1469 = vpack.c.b16 %v1429, %v1427
          %v1470 = vpack.c.b16 %v1430, %v1428
          %v1471 = vpack.c.b16 %v1433, %v1431
          %v1472 = vpack.c.b16 %v1434, %v1432
          %v1473 = vpack.c.b16 %v1437, %v1435
          %v1474 = vpack.c.b16 %v1438, %v1436
          %v1475 = vpack.c.b16 %v1441, %v1439
          %v1476 = vpack.c.b16 %v1442, %v1440
          %v1477 = vpack.c.b16 %v1445, %v1443
          %v1478 = vpack.c.b16 %v1446, %v1444
          %1511 = vmatpush.bf16.msra.mxu0 %v1461
          %1512 = vmatpush.bf16.msra.mxu0 %v1459
          %1513 = vmatpush.bf16.msra.mxu0 %v1457
          %1514 = vmatpush.bf16.msra.mxu0 %v1455
          %1515 = vmatpush.bf16.msra.mxu0 %v1453
          %1516 = vmatpush.bf16.msra.mxu0 %v1451
          %1517 = vmatpush.bf16.msra.mxu0 %v1449
          %1518 = vmatpush.bf16.msra.mxu0 %v1447
          %1519 = vmatmul.bf16.gmra.mxu0 %v1311
          %v1520 = vpop.f32.mrf.mxu0
          %v1521 = vadd.f32 %v1347, %v1520
          %v1522 = vpop.f32.mrf.mxu0
          %v1523 = vadd.f32 %v1347, %v1522
          %1524 = vdwg.mxu0
          %1525 = vmatpush.bf16.msra.mxu0 %v1477
          %1526 = vmatpush.bf16.msra.mxu0 %v1475
          %1527 = vmatpush.bf16.msra.mxu0 %v1473
          %1528 = vmatpush.bf16.msra.mxu0 %v1471
          %1529 = vmatpush.bf16.msra.mxu0 %v1469
          %1530 = vmatpush.bf16.msra.mxu0 %v1467
          %1531 = vmatpush.bf16.msra.mxu0 %v1465
          %1532 = vmatpush.bf16.msra.mxu0 %v1463
          %1533 = vmatmul.bf16.gmra.mxu0 %v1312
          %v1534 = vpop.f32.mrf.mxu0
          %v1535 = vadd.f32 %v1521, %v1534
          %v1536 = vpop.f32.mrf.mxu0
          %v1537 = vadd.f32 %v1523, %v1536
          %1538 = vdwg.mxu0
          %1539 = vmatpush.bf16.msra.mxu0 %v1462
          %1540 = vmatpush.bf16.msra.mxu0 %v1460
          %1541 = vmatpush.bf16.msra.mxu0 %v1458
          %1542 = vmatpush.bf16.msra.mxu0 %v1456
          %1543 = vmatpush.bf16.msra.mxu0 %v1454
          %1544 = vmatpush.bf16.msra.mxu0 %v1452
          %1545 = vmatpush.bf16.msra.mxu0 %v1450
          %1546 = vmatpush.bf16.msra.mxu0 %v1448
          %1547 = vmatmul.bf16.gmra.mxu0 %v1311
          %v1548 = vpop.f32.mrf.mxu0
          %v1549 = vadd.f32 %v1348, %v1548
          %v1550 = vpop.f32.mrf.mxu0
          %v1551 = vadd.f32 %v1348, %v1550
          %1552 = vdwg.mxu0
          %1553 = vmatpush.bf16.msra.mxu0 %v1478
          %1554 = vmatpush.bf16.msra.mxu0 %v1476
          %1555 = vmatpush.bf16.msra.mxu0 %v1474
          %1556 = vmatpush.bf16.msra.mxu0 %v1472
          %1557 = vmatpush.bf16.msra.mxu0 %v1470
          %1558 = vmatpush.bf16.msra.mxu0 %v1468
          %1559 = vmatpush.bf16.msra.mxu0 %v1466
          %1560 = vmatpush.bf16.msra.mxu0 %v1464
          %1561 = vmatmul.bf16.gmra.mxu0 %v1312
          %v1562 = vpop.f32.mrf.mxu0
          %v1563 = vadd.f32 %v1549, %v1562
          %v1564 = vpop.f32.mrf.mxu0
          %v1565 = vadd.f32 %v1551, %v1564
          %1566 = vdwg.mxu0
          %v1567 = vmax.f32 %v1535, 0.0
          %v1568 = vmax.f32 %v1563, 0.0
          %v1569 = vmax.f32 %v1537, 0.0
          %v1570 = vmax.f32 %v1565, 0.0
          %v1571 = vpack.c.bf16 %v1569, %v1567
          %v1572 = vpack.c.bf16 %v1570, %v1568
          %v1573 = vld [vmem:[#allocation14] sm:$0xff]
          %v1574 = vld [vmem:[#allocation14 + $0x8] sm:$0xff]
          %v1575 = vld [vmem:[#allocation14 + $0x10] sm:$0xff]
          %v1576 = vld [vmem:[#allocation14 + $0x18] sm:$0xff]
          %v1577 = vld [vmem:[#allocation14 + $0x20] sm:$0xff]
          %v1578 = vld [vmem:[#allocation14 + $0x28] sm:$0xff]
          %v1579 = vld [vmem:[#allocation14 + $0x30] sm:$0xff]
          %v1580 = vld [vmem:[#allocation14 + $0x38] sm:$0xff]
          %v1581 = vld [vmem:[#allocation14 + $0x40] sm:$0xff]
          %v1582 = vld [vmem:[#allocation14 + $0x48] sm:$0xff]
          %v1583 = vld [vmem:[#allocation14 + $0x50] sm:$0xff]
          %v1584 = vld [vmem:[#allocation14 + $0x58] sm:$0xff]
          %v1585 = vld [vmem:[#allocation14 + $0x60] sm:$0xff]
          %v1586 = vld [vmem:[#allocation14 + $0x68] sm:$0xff]
          %v1587 = vld [vmem:[#allocation14 + $0x70] sm:$0xff]
          %v1588 = vld [vmem:[#allocation14 + $0x78] sm:$0xff]
          %v1589 = vld [vmem:[#allocation14 + $0x80] sm:$0xff]
          %v1590 = vld [vmem:[#allocation14 + $0x88] sm:$0xff]
          %v1591 = vld [vmem:[#allocation14 + $0x90] sm:$0xff]
          %v1592 = vld [vmem:[#allocation14 + $0x98] sm:$0xff]
          %v1593 = vld [vmem:[#allocation14 + $0xa0] sm:$0xff]
          %v1594 = vld [vmem:[#allocation14 + $0xa8] sm:$0xff]
          %v1595 = vld [vmem:[#allocation14 + $0xb0] sm:$0xff]
          %v1596 = vld [vmem:[#allocation14 + $0xb8] sm:$0xff]
          %v1597 = vld [vmem:[#allocation14 + $0xc0] sm:$0xff]
          %v1598 = vld [vmem:[#allocation14 + $0xc8] sm:$0xff]
          %v1599 = vld [vmem:[#allocation14 + $0xd0] sm:$0xff]
          %v1600 = vld [vmem:[#allocation14 + $0xd8] sm:$0xff]
          %v1601 = vld [vmem:[#allocation14 + $0xe0] sm:$0xff]
          %v1602 = vld [vmem:[#allocation14 + $0xe8] sm:$0xff]
          %v1603 = vld [vmem:[#allocation14 + $0xf0] sm:$0xff]
          %v1604 = vld [vmem:[#allocation14 + $0xf8] sm:$0xff]
          %v1605 = vld [vmem:[%s10] sm:$0x3]
          %v1607 = vperm.slane %v1605, 0
          %v1608 = vperm.slane %v1605, 1
          %v1643 = vunpack.c.l.b16 %v1573
          %v1644 = vunpack.c.h.b16 %v1573
          %v1645 = vunpack.c.l.b16 %v1574
          %v1646 = vunpack.c.h.b16 %v1574
          %v1647 = vunpack.c.l.b16 %v1575
          %v1648 = vunpack.c.h.b16 %v1575
          %v1649 = vunpack.c.l.b16 %v1576
          %v1650 = vunpack.c.h.b16 %v1576
          %v1651 = vunpack.c.l.b16 %v1577
          %v1652 = vunpack.c.h.b16 %v1577
          %v1653 = vunpack.c.l.b16 %v1578
          %v1654 = vunpack.c.h.b16 %v1578
          %v1655 = vunpack.c.l.b16 %v1579
          %v1656 = vunpack.c.h.b16 %v1579
          %v1657 = vunpack.c.l.b16 %v1580
          %v1658 = vunpack.c.h.b16 %v1580
          %v1659 = vunpack.c.l.b16 %v1581
          %v1660 = vunpack.c.h.b16 %v1581
          %v1661 = vunpack.c.l.b16 %v1582
          %v1662 = vunpack.c.h.b16 %v1582
          %v1663 = vunpack.c.l.b16 %v1583
          %v1664 = vunpack.c.h.b16 %v1583
          %v1665 = vunpack.c.l.b16 %v1584
          %v1666 = vunpack.c.h.b16 %v1584
          %v1667 = vunpack.c.l.b16 %v1585
          %v1668 = vunpack.c.h.b16 %v1585
          %v1669 = vunpack.c.l.b16 %v1586
          %v1670 = vunpack.c.h.b16 %v1586
          %v1671 = vunpack.c.l.b16 %v1587
          %v1672 = vunpack.c.h.b16 %v1587
          %v1673 = vunpack.c.l.b16 %v1588
          %v1674 = vunpack.c.h.b16 %v1588
          %v1675 = vunpack.c.l.b16 %v1589
          %v1676 = vunpack.c.h.b16 %v1589
          %v1677 = vunpack.c.l.b16 %v1590
          %v1678 = vunpack.c.h.b16 %v1590
          %v1679 = vunpack.c.l.b16 %v1591
          %v1680 = vunpack.c.h.b16 %v1591
          %v1681 = vunpack.c.l.b16 %v1592
          %v1682 = vunpack.c.h.b16 %v1592
          %v1683 = vunpack.c.l.b16 %v1593
          %v1684 = vunpack.c.h.b16 %v1593
          %v1685 = vunpack.c.l.b16 %v1594
          %v1686 = vunpack.c.h.b16 %v1594
          %v1687 = vunpack.c.l.b16 %v1595
          %v1688 = vunpack.c.h.b16 %v1595
          %v1689 = vunpack.c.l.b16 %v1596
          %v1690 = vunpack.c.h.b16 %v1596
          %v1691 = vunpack.c.l.b16 %v1597
          %v1692 = vunpack.c.h.b16 %v1597
          %v1693 = vunpack.c.l.b16 %v1598
          %v1694 = vunpack.c.h.b16 %v1598
          %v1695 = vunpack.c.l.b16 %v1599
          %v1696 = vunpack.c.h.b16 %v1599
          %v1697 = vunpack.c.l.b16 %v1600
          %v1698 = vunpack.c.h.b16 %v1600
          %v1699 = vunpack.c.l.b16 %v1601
          %v1700 = vunpack.c.h.b16 %v1601
          %v1701 = vunpack.c.l.b16 %v1602
          %v1702 = vunpack.c.h.b16 %v1602
          %v1703 = vunpack.c.l.b16 %v1603
          %v1704 = vunpack.c.h.b16 %v1603
          %v1705 = vunpack.c.l.b16 %v1604
          %v1706 = vunpack.c.h.b16 %v1604
          %v1707 = vpack.c.b16 %v1645, %v1643
          %v1708 = vpack.c.b16 %v1646, %v1644
          %v1709 = vpack.c.b16 %v1649, %v1647
          %v1710 = vpack.c.b16 %v1650, %v1648
          %v1711 = vpack.c.b16 %v1653, %v1651
          %v1712 = vpack.c.b16 %v1654, %v1652
          %v1713 = vpack.c.b16 %v1657, %v1655
          %v1714 = vpack.c.b16 %v1658, %v1656
          %v1715 = vpack.c.b16 %v1661, %v1659
          %v1716 = vpack.c.b16 %v1662, %v1660
          %v1717 = vpack.c.b16 %v1665, %v1663
          %v1718 = vpack.c.b16 %v1666, %v1664
          %v1719 = vpack.c.b16 %v1669, %v1667
          %v1720 = vpack.c.b16 %v1670, %v1668
          %v1721 = vpack.c.b16 %v1673, %v1671
          %v1722 = vpack.c.b16 %v1674, %v1672
          %v1723 = vpack.c.b16 %v1677, %v1675
          %v1724 = vpack.c.b16 %v1678, %v1676
          %v1725 = vpack.c.b16 %v1681, %v1679
          %v1726 = vpack.c.b16 %v1682, %v1680
          %v1727 = vpack.c.b16 %v1685, %v1683
          %v1728 = vpack.c.b16 %v1686, %v1684
          %v1729 = vpack.c.b16 %v1689, %v1687
          %v1730 = vpack.c.b16 %v1690, %v1688
          %v1731 = vpack.c.b16 %v1693, %v1691
          %v1732 = vpack.c.b16 %v1694, %v1692
          %v1733 = vpack.c.b16 %v1697, %v1695
          %v1734 = vpack.c.b16 %v1698, %v1696
          %v1735 = vpack.c.b16 %v1701, %v1699
          %v1736 = vpack.c.b16 %v1702, %v1700
          %v1737 = vpack.c.b16 %v1705, %v1703
          %v1738 = vpack.c.b16 %v1706, %v1704
          %1771 = vmatpush.bf16.msra.mxu0 %v1721
          %1772 = vmatpush.bf16.msra.mxu0 %v1719
          %1773 = vmatpush.bf16.msra.mxu0 %v1717
          %1774 = vmatpush.bf16.msra.mxu0 %v1715
          %1775 = vmatpush.bf16.msra.mxu0 %v1713
          %1776 = vmatpush.bf16.msra.mxu0 %v1711
          %1777 = vmatpush.bf16.msra.mxu0 %v1709
          %1778 = vmatpush.bf16.msra.mxu0 %v1707
          %1779 = vmatmul.bf16.gmra.mxu0 %v1571
          %v1780 = vpop.f32.mrf.mxu0
          %v1781 = vadd.f32 %v1607, %v1780
          %v1782 = vpop.f32.mrf.mxu0
          %v1783 = vadd.f32 %v1607, %v1782
          %1784 = vdwg.mxu0
          %1785 = vmatpush.bf16.msra.mxu0 %v1737
          %1786 = vmatpush.bf16.msra.mxu0 %v1735
          %1787 = vmatpush.bf16.msra.mxu0 %v1733
          %1788 = vmatpush.bf16.msra.mxu0 %v1731
          %1789 = vmatpush.bf16.msra.mxu0 %v1729
          %1790 = vmatpush.bf16.msra.mxu0 %v1727
          %1791 = vmatpush.bf16.msra.mxu0 %v1725
          %1792 = vmatpush.bf16.msra.mxu0 %v1723
          %1793 = vmatmul.bf16.gmra.mxu0 %v1572
          %v1794 = vpop.f32.mrf.mxu0
          %v1795 = vadd.f32 %v1781, %v1794
          %v1796 = vpop.f32.mrf.mxu0
          %v1797 = vadd.f32 %v1783, %v1796
          %1798 = vdwg.mxu0
          %1799 = vmatpush.bf16.msra.mxu0 %v1722
          %1800 = vmatpush.bf16.msra.mxu0 %v1720
          %1801 = vmatpush.bf16.msra.mxu0 %v1718
          %1802 = vmatpush.bf16.msra.mxu0 %v1716
          %1803 = vmatpush.bf16.msra.mxu0 %v1714
          %1804 = vmatpush.bf16.msra.mxu0 %v1712
          %1805 = vmatpush.bf16.msra.mxu0 %v1710
          %1806 = vmatpush.bf16.msra.mxu0 %v1708
          %1807 = vmatmul.bf16.gmra.mxu0 %v1571
          %v1808 = vpop.f32.mrf.mxu0
          %v1809 = vadd.f32 %v1608, %v1808
          %v1810 = vpop.f32.mrf.mxu0
          %v1811 = vadd.f32 %v1608, %v1810
          %1812 = vdwg.mxu0
          %1813 = vmatpush.bf16.msra.mxu0 %v1738
          %1814 = vmatpush.bf16.msra.mxu0 %v1736
          %1815 = vmatpush.bf16.msra.mxu0 %v1734
          %1816 = vmatpush.bf16.msra.mxu0 %v1732
          %1817 = vmatpush.bf16.msra.mxu0 %v1730
          %1818 = vmatpush.bf16.msra.mxu0 %v1728
          %1819 = vmatpush.bf16.msra.mxu0 %v1726
          %1820 = vmatpush.bf16.msra.mxu0 %v1724
          %1821 = vmatmul.bf16.gmra.mxu0 %v1572
          %v1822 = vpop.f32.mrf.mxu0
          %v1823 = vadd.f32 %v1809, %v1822
          %v1824 = vpop.f32.mrf.mxu0
          %v1825 = vadd.f32 %v1811, %v1824
          %1826 = vdwg.mxu0
          %v1827 = vadd.f32 %v1307, %v1795
          %v1828 = vadd.f32 %v1308, %v1823
          %v1829 = vadd.f32 %v1309, %v1797
          %v1830 = vadd.f32 %v1310, %v1825
          %v1831 = vmax.f32 %v1827, 0.0
          %v1832 = vmax.f32 %v1828, 0.0
          %v1833 = vmax.f32 %v1829, 0.0
          %v1834 = vmax.f32 %v1830, 0.0
          %v1835 = vpack.c.bf16 %v1833, %v1831
          %v1836 = vpack.c.bf16 %v1834, %v1832
          %v1837 = vld [vmem:[#allocation15] sm:$0xff]
          %v1838 = vld [vmem:[#allocation15 + $0x8] sm:$0xff]
          %v1839 = vld [vmem:[#allocation15 + $0x10] sm:$0xff]
          %v1840 = vld [vmem:[#allocation15 + $0x18] sm:$0xff]
          %v1841 = vld [vmem:[#allocation15 + $0x20] sm:$0xff]
          %v1842 = vld [vmem:[#allocation15 + $0x28] sm:$0xff]
          %v1843 = vld [vmem:[#allocation15 + $0x30] sm:$0xff]
          %v1844 = vld [vmem:[#allocation15 + $0x38] sm:$0xff]
          %v1845 = vld [vmem:[#allocation15 + $0x40] sm:$0xff]
          %v1846 = vld [vmem:[#allocation15 + $0x48] sm:$0xff]
          %v1847 = vld [vmem:[#allocation15 + $0x50] sm:$0xff]
          %v1848 = vld [vmem:[#allocation15 + $0x58] sm:$0xff]
          %v1849 = vld [vmem:[#allocation15 + $0x60] sm:$0xff]
          %v1850 = vld [vmem:[#allocation15 + $0x68] sm:$0xff]
          %v1851 = vld [vmem:[#allocation15 + $0x70] sm:$0xff]
          %v1852 = vld [vmem:[#allocation15 + $0x78] sm:$0xff]
          %v1853 = vld [vmem:[#allocation15 + $0x80] sm:$0xff]
          %v1854 = vld [vmem:[#allocation15 + $0x88] sm:$0xff]
          %v1855 = vld [vmem:[#allocation15 + $0x90] sm:$0xff]
          %v1856 = vld [vmem:[#allocation15 + $0x98] sm:$0xff]
          %v1857 = vld [vmem:[#allocation15 + $0xa0] sm:$0xff]
          %v1858 = vld [vmem:[#allocation15 + $0xa8] sm:$0xff]
          %v1859 = vld [vmem:[#allocation15 + $0xb0] sm:$0xff]
          %v1860 = vld [vmem:[#allocation15 + $0xb8] sm:$0xff]
          %v1861 = vld [vmem:[#allocation15 + $0xc0] sm:$0xff]
          %v1862 = vld [vmem:[#allocation15 + $0xc8] sm:$0xff]
          %v1863 = vld [vmem:[#allocation15 + $0xd0] sm:$0xff]
          %v1864 = vld [vmem:[#allocation15 + $0xd8] sm:$0xff]
          %v1865 = vld [vmem:[#allocation15 + $0xe0] sm:$0xff]
          %v1866 = vld [vmem:[#allocation15 + $0xe8] sm:$0xff]
          %v1867 = vld [vmem:[#allocation15 + $0xf0] sm:$0xff]
          %v1868 = vld [vmem:[#allocation15 + $0xf8] sm:$0xff]
          %v1869 = vld [vmem:[%s12] sm:$0x3]
          %v1871 = vperm.slane %v1869, 0
          %v1872 = vperm.slane %v1869, 1
          %v1907 = vunpack.c.l.b16 %v1837
          %v1908 = vunpack.c.h.b16 %v1837
          %v1909 = vunpack.c.l.b16 %v1838
          %v1910 = vunpack.c.h.b16 %v1838
          %v1911 = vunpack.c.l.b16 %v1839
          %v1912 = vunpack.c.h.b16 %v1839
          %v1913 = vunpack.c.l.b16 %v1840
          %v1914 = vunpack.c.h.b16 %v1840
          %v1915 = vunpack.c.l.b16 %v1841
          %v1916 = vunpack.c.h.b16 %v1841
          %v1917 = vunpack.c.l.b16 %v1842
          %v1918 = vunpack.c.h.b16 %v1842
          %v1919 = vunpack.c.l.b16 %v1843
          %v1920 = vunpack.c.h.b16 %v1843
          %v1921 = vunpack.c.l.b16 %v1844
          %v1922 = vunpack.c.h.b16 %v1844
          %v1923 = vunpack.c.l.b16 %v1845
          %v1924 = vunpack.c.h.b16 %v1845
          %v1925 = vunpack.c.l.b16 %v1846
          %v1926 = vunpack.c.h.b16 %v1846
          %v1927 = vunpack.c.l.b16 %v1847
          %v1928 = vunpack.c.h.b16 %v1847
          %v1929 = vunpack.c.l.b16 %v1848
          %v1930 = vunpack.c.h.b16 %v1848
          %v1931 = vunpack.c.l.b16 %v1849
          %v1932 = vunpack.c.h.b16 %v1849
          %v1933 = vunpack.c.l.b16 %v1850
          %v1934 = vunpack.c.h.b16 %v1850
          %v1935 = vunpack.c.l.b16 %v1851
          %v1936 = vunpack.c.h.b16 %v1851
          %v1937 = vunpack.c.l.b16 %v1852
          %v1938 = vunpack.c.h.b16 %v1852
          %v1939 = vunpack.c.l.b16 %v1853
          %v1940 = vunpack.c.h.b16 %v1853
          %v1941 = vunpack.c.l.b16 %v1854
          %v1942 = vunpack.c.h.b16 %v1854
          %v1943 = vunpack.c.l.b16 %v1855
          %v1944 = vunpack.c.h.b16 %v1855
          %v1945 = vunpack.c.l.b16 %v1856
          %v1946 = vunpack.c.h.b16 %v1856
          %v1947 = vunpack.c.l.b16 %v1857
          %v1948 = vunpack.c.h.b16 %v1857
          %v1949 = vunpack.c.l.b16 %v1858
          %v1950 = vunpack.c.h.b16 %v1858
          %v1951 = vunpack.c.l.b16 %v1859
          %v1952 = vunpack.c.h.b16 %v1859
          %v1953 = vunpack.c.l.b16 %v1860
          %v1954 = vunpack.c.h.b16 %v1860
          %v1955 = vunpack.c.l.b16 %v1861
          %v1956 = vunpack.c.h.b16 %v1861
          %v1957 = vunpack.c.l.b16 %v1862
          %v1958 = vunpack.c.h.b16 %v1862
          %v1959 = vunpack.c.l.b16 %v1863
          %v1960 = vunpack.c.h.b16 %v1863
          %v1961 = vunpack.c.l.b16 %v1864
          %v1962 = vunpack.c.h.b16 %v1864
          %v1963 = vunpack.c.l.b16 %v1865
          %v1964 = vunpack.c.h.b16 %v1865
          %v1965 = vunpack.c.l.b16 %v1866
          %v1966 = vunpack.c.h.b16 %v1866
          %v1967 = vunpack.c.l.b16 %v1867
          %v1968 = vunpack.c.h.b16 %v1867
          %v1969 = vunpack.c.l.b16 %v1868
          %v1970 = vunpack.c.h.b16 %v1868
          %v1971 = vpack.c.b16 %v1909, %v1907
          %v1972 = vpack.c.b16 %v1910, %v1908
          %v1973 = vpack.c.b16 %v1913, %v1911
          %v1974 = vpack.c.b16 %v1914, %v1912
          %v1975 = vpack.c.b16 %v1917, %v1915
          %v1976 = vpack.c.b16 %v1918, %v1916
          %v1977 = vpack.c.b16 %v1921, %v1919
          %v1978 = vpack.c.b16 %v1922, %v1920
          %v1979 = vpack.c.b16 %v1925, %v1923
          %v1980 = vpack.c.b16 %v1926, %v1924
          %v1981 = vpack.c.b16 %v1929, %v1927
          %v1982 = vpack.c.b16 %v1930, %v1928
          %v1983 = vpack.c.b16 %v1933, %v1931
          %v1984 = vpack.c.b16 %v1934, %v1932
          %v1985 = vpack.c.b16 %v1937, %v1935
          %v1986 = vpack.c.b16 %v1938, %v1936
          %v1987 = vpack.c.b16 %v1941, %v1939
          %v1988 = vpack.c.b16 %v1942, %v1940
          %v1989 = vpack.c.b16 %v1945, %v1943
          %v1990 = vpack.c.b16 %v1946, %v1944
          %v1991 = vpack.c.b16 %v1949, %v1947
          %v1992 = vpack.c.b16 %v1950, %v1948
          %v1993 = vpack.c.b16 %v1953, %v1951
          %v1994 = vpack.c.b16 %v1954, %v1952
          %v1995 = vpack.c.b16 %v1957, %v1955
          %v1996 = vpack.c.b16 %v1958, %v1956
          %v1997 = vpack.c.b16 %v1961, %v1959
          %v1998 = vpack.c.b16 %v1962, %v1960
          %v1999 = vpack.c.b16 %v1965, %v1963
          %v2000 = vpack.c.b16 %v1966, %v1964
          %v2001 = vpack.c.b16 %v1969, %v1967
          %v2002 = vpack.c.b16 %v1970, %v1968
          %2035 = vmatpush.bf16.msra.mxu0 %v1985
          %2036 = vmatpush.bf16.msra.mxu0 %v1983
          %2037 = vmatpush.bf16.msra.mxu0 %v1981
          %2038 = vmatpush.bf16.msra.mxu0 %v1979
          %2039 = vmatpush.bf16.msra.mxu0 %v1977
          %2040 = vmatpush.bf16.msra.mxu0 %v1975
          %2041 = vmatpush.bf16.msra.mxu0 %v1973
          %2042 = vmatpush.bf16.msra.mxu0 %v1971
          %2043 = vmatmul.bf16.gmra.mxu0 %v1835
          %v2044 = vpop.f32.mrf.mxu0
          %v2045 = vadd.f32 %v1871, %v2044
          %v2046 = vpop.f32.mrf.mxu0
          %v2047 = vadd.f32 %v1871, %v2046
          %2048 = vdwg.mxu0
          %2049 = vmatpush.bf16.msra.mxu0 %v2001
          %2050 = vmatpush.bf16.msra.mxu0 %v1999
          %2051 = vmatpush.bf16.msra.mxu0 %v1997
          %2052 = vmatpush.bf16.msra.mxu0 %v1995
          %2053 = vmatpush.bf16.msra.mxu0 %v1993
          %2054 = vmatpush.bf16.msra.mxu0 %v1991
          %2055 = vmatpush.bf16.msra.mxu0 %v1989
          %2056 = vmatpush.bf16.msra.mxu0 %v1987
          %2057 = vmatmul.bf16.gmra.mxu0 %v1836
          %v2058 = vpop.f32.mrf.mxu0
          %v2059 = vadd.f32 %v2045, %v2058
          %v2060 = vpop.f32.mrf.mxu0
          %v2061 = vadd.f32 %v2047, %v2060
          %2062 = vdwg.mxu0
          %2063 = vmatpush.bf16.msra.mxu0 %v1986
          %2064 = vmatpush.bf16.msra.mxu0 %v1984
          %2065 = vmatpush.bf16.msra.mxu0 %v1982
          %2066 = vmatpush.bf16.msra.mxu0 %v1980
          %2067 = vmatpush.bf16.msra.mxu0 %v1978
          %2068 = vmatpush.bf16.msra.mxu0 %v1976
          %2069 = vmatpush.bf16.msra.mxu0 %v1974
          %2070 = vmatpush.bf16.msra.mxu0 %v1972
          %2071 = vmatmul.bf16.gmra.mxu0 %v1835
          %v2072 = vpop.f32.mrf.mxu0
          %v2073 = vadd.f32 %v1872, %v2072
          %v2074 = vpop.f32.mrf.mxu0
          %v2075 = vadd.f32 %v1872, %v2074
          %2076 = vdwg.mxu0
          %2077 = vmatpush.bf16.msra.mxu0 %v2002
          %2078 = vmatpush.bf16.msra.mxu0 %v2000
          %2079 = vmatpush.bf16.msra.mxu0 %v1998
          %2080 = vmatpush.bf16.msra.mxu0 %v1996
          %2081 = vmatpush.bf16.msra.mxu0 %v1994
          %2082 = vmatpush.bf16.msra.mxu0 %v1992
          %2083 = vmatpush.bf16.msra.mxu0 %v1990
          %2084 = vmatpush.bf16.msra.mxu0 %v1988
          %2085 = vmatmul.bf16.gmra.mxu0 %v1836
          %v2086 = vpop.f32.mrf.mxu0
          %v2087 = vadd.f32 %v2073, %v2086
          %v2088 = vpop.f32.mrf.mxu0
          %v2089 = vadd.f32 %v2075, %v2088
          %2090 = vdwg.mxu0
          %2091 = vst [vmem:[#allocation17] sm:$0xff] %v2059
          %2092 = vst [vmem:[#allocation17 + $0x8] sm:$0xff] %v2087
          %2093 = vst [vmem:[#allocation17 + $0x10] sm:$0xff] %v2061
          %2094 = vst [vmem:[#allocation17 + $0x18] sm:$0xff] %v2089
        $region112: #{tpu_custom_call.1} parent=71 // pred_fallthru
          _
        // Predicated region
        $region113: #{tpu_custom_call.1} parent=71 // pred_check
          %p2095 = pneg %p349
        $region114: #{tpu_custom_call.1} parent=71 // pred_check_branch
          %2097 = sbr.rel (%p2095) target = $region116
        $region115: #{tpu_custom_call.1} parent=71 // pred_region
          %s2098 = smul.u32 2, %s38
          %2100 = vsyncadd [#allocation5], 0
          %s2101 = smul.addr %s2098, 2
          %s2102 = smul.addr %s2101, 8
          %s2103 = scalar_lea.hbm %s13, %s2102
          %s2104 = sshll.u32 [#allocation17], 4
          %s2105 = int_to_ptr.vmem [resolvable:$true] %s2104
          %s2106 = sshll.u32 %s2103, 4
          %s2107 = int_to_ptr.hbm [resolvable:$true] %s2106
          %2112 = dma.vmem_to_hbm [thread:$0]  %s2105, 512, %s2107, [#allocation5], 256, 256, 16
        $region116: #{tpu_custom_call.1} parent=71 // pred_fallthru
          _
        // Predicated region
        $region117: #{tpu_custom_call.1} parent=71 // pred_check
          %p2113 = pneg %p349
        $region118: #{tpu_custom_call.1} parent=71 // pred_check_branch
          %2115 = sbr.rel (%p2113) target = $region120
        $region119: #{tpu_custom_call.1} parent=71 // pred_region
          %2117 = dma.done [#allocation5], 512
        $region120: #{tpu_custom_call.1} parent=71 // pred_fallthru
          _
      $region72: #{tpu_custom_call.1} parent=5 // pred_fallthru
        _
      %p2118 = scmp.le.s32.totalorder 2, %s29
      // Predicated region
      $region121: #{tpu_custom_call.1} parent=5 // pred_check
        %p2119 = pneg %p2118
      $region122: #{tpu_custom_call.1} parent=5 // pred_check_branch
        %2121 = sbr.rel (%p2119) target = $region124
      $region123: #{tpu_custom_call.1} parent=5 // pred_region
        %s2122 = ssub.s32 %s29, 2
      $region124: #{tpu_custom_call.1} parent=5 // pred_fallthru
        _
    $region6: #{tpu_custom_call.1} parent=1 // loop_footer
      %s33 = sadd.s32 1, %s29
    $region7: #{tpu_custom_call.1} parent=1 // loop_footer_branch
      %28 = sbr.rel target = $region3
    $region8: #{tpu_custom_call.1} parent=1 // loop_exit
      _
    %2123 = vsyncpa [#allocation4], 1
    %s2124 = scalar_lea.sflag [#allocation4], 1
    %2125 = vsyncpa %s2124, 1
    %2126 = vsyncpa [#allocation7], 1
    %s2127 = scalar_lea.sflag [#allocation7], 1
    %2128 = vsyncpa %s2127, 1
    %2129 = vsyncpa [#allocation10], 1
    %2130 = vsyncpa [#allocation13], 1
    %2131 = vsyncpa [#allocation16], 1
    %2132 = vsyncpa [#allocation5], 1
    %s2133 = scalar_lea.sflag [#allocation5], 1
    %2134 = vsyncpa %s2133, 1

</llo_original>
